<compile_context>
chip_gen: v7x
topology: tpu7x:2x2x1
jax: 0.10.0
libtpu: 0.0.40
codegen_flags: <defaults>
</compile_context>

<pallas_src>
import math
import jax
import jax.numpy as jnp
from jax import lax
from jax.experimental import pallas as pl
from jax.experimental.pallas import tpu as pltpu

D_IN = 3
D_K = 8
D_V = 3
D_KV = D_K + D_V
DROP_P = 0.5
SCALE = float(D_K ** 0.5)   # multiply, matching the PyTorch source
TQ_DEFAULT = 128            # query-tile rows per grid step


def _round_up(x, m):
    return ((x + m - 1) // m) * m


def _attn_kernel(xq_ref, xf_ref, wq_ref, bq_ref, wkv_ref, bkv_ref, mask_ref, o_ref):
    xq = xq_ref[...]                    # (TQ, D_IN)  query-row tile
    xf = xf_ref[...]                    # (N,  D_IN)  full input (for k / v)

    # q already carries the sqrt(d_k) score scale (folded into wq/bq at init).
    q = jnp.dot(xq, wq_ref[...], preferred_element_type=jnp.float32) + bq_ref[...]    # (TQ, D_K)
    kv = jnp.dot(xf, wkv_ref[...], preferred_element_type=jnp.float32) + bkv_ref[...]  # (N, D_K+D_V)
    k = kv[:, :D_K]                     # (N, D_K)
    v = kv[:, D_K:]                     # (N, D_V)

    # Scores: contract the feature dim of both operands (no explicit k.T).
    s = lax.dot_general(q, k, dimension_numbers=(((1,), (1,)), ((), ())),
                        preferred_element_type=jnp.float32)                 # (TQ, N)

    # Numerically stable softmax over the key axis.
    s = s - jnp.max(s, axis=-1, keepdims=True)
    e = jnp.exp(s)
    p = e * pl.reciprocal(jnp.sum(e, axis=-1, keepdims=True), approx=True)

    # Inverted dropout: mask already contains {0, 1/(1-p)}.
    p = p * mask_ref[...]

    # Output tile: (TQ, D_V)
    o_ref[...] = jnp.dot(p, v, preferred_element_type=jnp.float32)


def model_forward(x, params, dropout_key, p_drop=DROP_P):
    """x: (N, D_IN) float32. params: dict from init_params. Returns (N, D_V)."""
    n = x.shape[0]
    tq = min(TQ_DEFAULT, _round_up(n, 8))
    grid = (pl.cdiv(n, tq),)

    # Host-side deterministic dropout mask (scaled inverted-dropout keep mask).
    u = jax.random.uniform(dropout_key, (n, n), dtype=jnp.float32)
    mask = jnp.where(u >= p_drop, 1.0 / (1.0 - p_drop), 0.0).astype(jnp.float32)

    cost = pl.CostEstimate(
        flops=int(2 * n * D_IN * (D_K + D_KV) + 2 * n * n * D_K + 2 * n * n * D_V),
        transcendentals=int(n * n),
        bytes_accessed=int(4 * (2 * n * D_IN + n * n + n * D_V
                                + D_IN * (D_K + D_KV) + (D_K + D_KV))),
    )

    return pl.pallas_call(
        _attn_kernel,
        out_shape=jax.ShapeDtypeStruct((n, D_V), jnp.float32),
        grid=grid,
        in_specs=[
            pl.BlockSpec((tq, D_IN), lambda i: (i, 0)),      # x: query tile
            pl.BlockSpec((n, D_IN), lambda i: (0, 0)),       # x: full (k / v source)
            pl.BlockSpec((D_IN, D_K), lambda i: (0, 0)),     # wq (pre-scaled)
            pl.BlockSpec((1, D_K), lambda i: (0, 0)),        # bq (pre-scaled)
            pl.BlockSpec((D_IN, D_KV), lambda i: (0, 0)),    # fused wk|wv
            pl.BlockSpec((1, D_KV), lambda i: (0, 0)),       # fused bk|bv
            pl.BlockSpec((tq, n), lambda i: (i, 0)),         # dropout mask tile
        ],
        out_specs=pl.BlockSpec((tq, D_V), lambda i: (i, 0)),
        compiler_params=pltpu.CompilerParams(
            dimension_semantics=("parallel",)),
        cost_estimate=cost,
    )(
        x, x,
        params["wq_t"], params["bq"],
        params["wkv_t"], params["bkv"],
        mask,
    )


def init_params(key):
    """Deterministic init mimicking torch.nn.Linear (fan_in-based uniform)."""
    ks = jax.random.split(key, 6)

    def linear(kw, kb, fan_in, fan_out):
        bound = 1.0 / math.sqrt(fan_in)
        w = jax.random.uniform(kw, (fan_out, fan_in), jnp.float32, -bound, bound)
        b = jax.random.uniform(kb, (fan_out,), jnp.float32, -bound, bound)
        # pass W transposed as (fan_in, fan_out); bias as (1, fan_out) for broadcast
        return w.T, b.reshape(1, fan_out)

    wq_t, bq = linear(ks[0], ks[1], D_IN, D_K)
    wk_t, bk = linear(ks[2], ks[3], D_IN, D_K)
    wv_t, bv = linear(ks[4], ks[5], D_IN, D_V)

    # Fold the score scale (multiplied by sqrt(d_k), as in the PyTorch source) into q.
    wq_t = wq_t * SCALE
    bq = bq * SCALE

    # Fuse the k and v projections into one matmul.
    wkv_t = jnp.concatenate([wk_t, wv_t], axis=1)   # (D_IN, D_K + D_V)
    bkv = jnp.concatenate([bk, bv], axis=1)         # (1, D_K + D_V)

    return dict(wq_t=wq_t, bq=bq, wkv_t=wkv_t, bkv=bkv)


if __name__ == "__main__":
    key = jax.random.PRNGKey(0)
    k_param, k_x, k_drop = jax.random.split(key, 3)

    params = init_params(k_param)
    N = 256   # small row count; grid of 2 query tiles (original used 1x3; any N works)
    x = jax.random.normal(k_x, (N, D_IN), dtype=jnp.float32)

    out = model_forward(x, params, k_drop)
    out = jax.block_until_ready(out)
    assert out.shape == (N, D_V) and out.dtype == jnp.float32
    assert bool(jnp.isfinite(out).all())
    print("KERNEL_OK")
</pallas_src>

<mosaic_0001>
module attributes {stable_mosaic.version = 11 : i64} {
  func.func @_attn_kernel(%arg0: i32, %arg1: memref<128x3xf32, #tpu.memory_space<vmem>>, %arg2: memref<256x3xf32, #tpu.memory_space<vmem>>, %arg3: memref<3x8xf32, #tpu.memory_space<vmem>>, %arg4: memref<1x8xf32, #tpu.memory_space<vmem>>, %arg5: memref<3x11xf32, #tpu.memory_space<vmem>>, %arg6: memref<1x11xf32, #tpu.memory_space<vmem>>, %arg7: memref<128x256xf32, #tpu.memory_space<vmem>>, %arg8: memref<128x3xf32, #tpu.memory_space<vmem>>) attributes {dimension_semantics = [#tpu.dimension_semantics<parallel>], iteration_bounds = array<i64: 2>, scalar_prefetch = 0 : i64, scratch_operands = 0 : i64, tpu.core_type = #tpu.core_type<tc>, window_params = [{transform_indices = @transform_0, window_bounds = array<i64: 128, 3>}, {pipeline_mode = #tpu.pipeline_mode<synchronous>, transform_indices = @transform_1, window_bounds = array<i64: 256, 3>}, {pipeline_mode = #tpu.pipeline_mode<synchronous>, transform_indices = @transform_2, window_bounds = array<i64: 3, 8>}, {pipeline_mode = #tpu.pipeline_mode<synchronous>, transform_indices = @transform_3, window_bounds = array<i64: 1, 8>}, {pipeline_mode = #tpu.pipeline_mode<synchronous>, transform_indices = @transform_4, window_bounds = array<i64: 3, 11>}, {pipeline_mode = #tpu.pipeline_mode<synchronous>, transform_indices = @transform_5, window_bounds = array<i64: 1, 11>}, {transform_indices = @transform_6, window_bounds = array<i64: 128, 256>}, {transform_indices = @transform_7, window_bounds = array<i64: 128, 3>}]} {
    %c0 = arith.constant 0 : index
    %c0_0 = arith.constant 0 : index
    %0 = vector.load %arg1[%c0, %c0_0] : memref<128x3xf32, #tpu.memory_space<vmem>>, vector<128x3xf32>
    %c0_1 = arith.constant 0 : index
    %c0_2 = arith.constant 0 : index
    %1 = vector.load %arg2[%c0_1, %c0_2] : memref<256x3xf32, #tpu.memory_space<vmem>>, vector<256x3xf32>
    %c0_3 = arith.constant 0 : index
    %c0_4 = arith.constant 0 : index
    %2 = vector.load %arg3[%c0_3, %c0_4] : memref<3x8xf32, #tpu.memory_space<vmem>>, vector<3x8xf32>
    %cst = arith.constant dense<0.000000e+00> : vector<128x8xf32>
    %3 = tpu.matmul %0, %2, %cst {dimension_numbers = #tpu.dot_dimension_numbers<[1], [0], [0], [1], [0, 0, 1, 1], [], []>} : vector<128x3xf32>, vector<3x8xf32>, vector<128x8xf32> -> vector<128x8xf32>
    %c0_5 = arith.constant 0 : index
    %c0_6 = arith.constant 0 : index
    %4 = vector.load %arg4[%c0_5, %c0_6] : memref<1x8xf32, #tpu.memory_space<vmem>>, vector<1x8xf32>
    %5 = vector.broadcast %4 : vector<1x8xf32> to vector<128x8xf32>
    %6 = arith.addf %3, %5 : vector<128x8xf32>
    %c0_7 = arith.constant 0 : index
    %c0_8 = arith.constant 0 : index
    %7 = vector.load %arg5[%c0_7, %c0_8] : memref<3x11xf32, #tpu.memory_space<vmem>>, vector<3x11xf32>
    %cst_9 = arith.constant dense<0.000000e+00> : vector<256x11xf32>
    %8 = tpu.matmul %1, %7, %cst_9 {dimension_numbers = #tpu.dot_dimension_numbers<[1], [0], [0], [1], [0, 0, 1, 1], [], []>} : vector<256x3xf32>, vector<3x11xf32>, vector<256x11xf32> -> vector<256x11xf32>
    %c0_10 = arith.constant 0 : index
    %c0_11 = arith.constant 0 : index
    %9 = vector.load %arg6[%c0_10, %c0_11] : memref<1x11xf32, #tpu.memory_space<vmem>>, vector<1x11xf32>
    %10 = vector.broadcast %9 : vector<1x11xf32> to vector<256x11xf32>
    %11 = arith.addf %8, %10 : vector<256x11xf32>
    %12 = vector.extract_strided_slice %11 {offsets = [0, 0], sizes = [256, 8], strides = [1, 1]} : vector<256x11xf32> to vector<256x8xf32>
    %13 = vector.extract_strided_slice %11 {offsets = [0, 8], sizes = [256, 3], strides = [1, 1]} : vector<256x11xf32> to vector<256x3xf32>
    %cst_12 = arith.constant dense<0.000000e+00> : vector<128x256xf32>
    %14 = tpu.matmul %6, %12, %cst_12 {dimension_numbers = #tpu.dot_dimension_numbers<[1], [1], [0], [0], [0, 0, 1, 0], [], []>} : vector<128x8xf32>, vector<256x8xf32>, vector<128x256xf32> -> vector<128x256xf32>
    %cst_13 = arith.constant dense<0xFF800000> : vector<128xf32>
    %15 = vector.multi_reduction <maximumf>, %14, %cst_13 [1] : vector<128x256xf32> to vector<128xf32>
    %16 = vector.shape_cast %15 : vector<128xf32> to vector<128x1xf32>
    %17 = vector.broadcast %16 : vector<128x1xf32> to vector<128x256xf32>
    %18 = arith.subf %14, %17 : vector<128x256xf32>
    %19 = math.exp %18 : vector<128x256xf32>
    %cst_14 = arith.constant dense<0.000000e+00> : vector<128xf32>
    %20 = vector.multi_reduction <add>, %19, %cst_14 [1] : vector<128x256xf32> to vector<128xf32>
    %21 = vector.shape_cast %20 : vector<128xf32> to vector<128x1xf32>
    %22 = tpu.reciprocal %21 {approx = true} : vector<128x1xf32> -> vector<128x1xf32>
    %23 = vector.broadcast %22 : vector<128x1xf32> to vector<128x256xf32>
    %24 = arith.mulf %19, %23 : vector<128x256xf32>
    %c0_15 = arith.constant 0 : index
    %c0_16 = arith.constant 0 : index
    %25 = vector.load %arg7[%c0_15, %c0_16] : memref<128x256xf32, #tpu.memory_space<vmem>>, vector<128x256xf32>
    %26 = arith.mulf %24, %25 : vector<128x256xf32>
    %cst_17 = arith.constant dense<0.000000e+00> : vector<128x3xf32>
    %27 = tpu.matmul %26, %13, %cst_17 {dimension_numbers = #tpu.dot_dimension_numbers<[1], [0], [0], [1], [0, 0, 1, 1], [], []>} : vector<128x256xf32>, vector<256x3xf32>, vector<128x3xf32> -> vector<128x3xf32>
    %c0_18 = arith.constant 0 : index
    %c0_19 = arith.constant 0 : index
    %28 = vector.load %arg8[%c0_18, %c0_19] : memref<128x3xf32, #tpu.memory_space<vmem>>, vector<128x3xf32>
    tpu.vector_store %arg8[%c0_18, %c0_19], %27 {strides = array<i32>} : memref<128x3xf32, #tpu.memory_space<vmem>>, vector<128x3xf32>,
    return
  }
  func.func @transform_0(%arg0: i32) -> (i32, i32) {
    %c0_i32 = arith.constant 0 : i32
    %c0_i32_0 = arith.constant 0 : i32
    return %arg0, %c0_i32 : i32, i32
  }
  func.func @transform_1(%arg0: i32) -> (i32, i32) {
    %c0_i32 = arith.constant 0 : i32
    %c0_i32_0 = arith.constant 0 : i32
    %c0_i32_1 = arith.constant 0 : i32
    return %c0_i32, %c0_i32_0 : i32, i32
  }
  func.func @transform_2(%arg0: i32) -> (i32, i32) {
    %c0_i32 = arith.constant 0 : i32
    %c0_i32_0 = arith.constant 0 : i32
    %c0_i32_1 = arith.constant 0 : i32
    return %c0_i32, %c0_i32_0 : i32, i32
  }
  func.func @transform_3(%arg0: i32) -> (i32, i32) {
    %c0_i32 = arith.constant 0 : i32
    %c0_i32_0 = arith.constant 0 : i32
    %c0_i32_1 = arith.constant 0 : i32
    return %c0_i32, %c0_i32_0 : i32, i32
  }
  func.func @transform_4(%arg0: i32) -> (i32, i32) {
    %c0_i32 = arith.constant 0 : i32
    %c0_i32_0 = arith.constant 0 : i32
    %c0_i32_1 = arith.constant 0 : i32
    return %c0_i32, %c0_i32_0 : i32, i32
  }
  func.func @transform_5(%arg0: i32) -> (i32, i32) {
    %c0_i32 = arith.constant 0 : i32
    %c0_i32_0 = arith.constant 0 : i32
    %c0_i32_1 = arith.constant 0 : i32
    return %c0_i32, %c0_i32_0 : i32, i32
  }
  func.func @transform_6(%arg0: i32) -> (i32, i32) {
    %c0_i32 = arith.constant 0 : i32
    %c0_i32_0 = arith.constant 0 : i32
    return %arg0, %c0_i32 : i32, i32
  }
  func.func @transform_7(%arg0: i32) -> (i32, i32) {
    %c0_i32 = arith.constant 0 : i32
    %c0_i32_0 = arith.constant 0 : i32
    return %arg0, %c0_i32 : i32, i32
  }
}

</mosaic_0001>

<llo_original>
// kernel: tpu_custom_call.1
$region0: #{tpu_custom_call.1}
  #allocation0 [shape = 'u32[]', space=smem, size = 0x4, offset = 0x4, fixed_abs, tag = 'smem constant byte address 0x4 - core index']
  #allocation1 [shape = 'u32[144,128]{1,0:T(1,128)}', space=vmem, size = 0x12000, scoped, tag = 'internal scratch']
  %s0 = inlined_call_operand.vmem [shape: f32[256,3], index: 0, kind: input, shape index: {}]
  %s1 = inlined_call_operand.vmem [shape: f32[256,3], index: 1, kind: input, shape index: {}]
  %s2 = inlined_call_operand.vmem [shape: f32[3,8], index: 2, kind: input, shape index: {}]
  %s3 = inlined_call_operand.vmem [shape: f32[1,8], index: 3, kind: input, shape index: {}]
  %s4 = inlined_call_operand.vmem [shape: f32[3,11], index: 4, kind: input, shape index: {}]
  %s5 = inlined_call_operand.vmem [shape: f32[1,11], index: 5, kind: input, shape index: {}]
  %s6 = inlined_call_operand.vmem [shape: f32[256,256], index: 6, kind: input, shape index: {}]
  %s7 = inlined_call_operand.vmem [shape: f32[256,3], index: 7, kind: output, shape index: {}]
  %s8 = sld [smem:[#allocation0]]
  $region61: #{tpu_custom_call.1} parent=0
    _
  %s10 = ssub.s32 1, %s8
  %s11 = scalar_select 0, %s10, %s8
  loop: start=0, step=1, limit=4
  $region2: #{tpu_custom_call.1} parent=0 // loop_pre_header
    _
  $region3: #{tpu_custom_call.1} parent=0 // loop_header
    %s13 = sphi 0, %s17
    %p14 = scmp.ge.s32.totalorder %s13, 4
    %s23 = sphi 0, %s25
    %s26 = sphi 0, %s23
    %s27 = sphi 0, %s26
    %s43 = sphi 0, %s27
    %s47 = sphi 0, %s47
    %s49 = sphi 0, %s47
    %s50 = sphi 0, %s49
    %s64 = sphi 0, %s50
    %s68 = sphi 0, %s68
    %s70 = sphi 0, %s68
    %s71 = sphi 0, %s70
    %s85 = sphi 0, %s71
    %s89 = sphi 0, %s89
    %s91 = sphi 0, %s89
    %s92 = sphi 0, %s91
    %s106 = sphi 0, %s92
    %s110 = sphi 0, %s110
    %s112 = sphi 0, %s110
    %s113 = sphi 0, %s112
    %s127 = sphi 0, %s113
    %s131 = sphi 0, %s131
    %s133 = sphi 0, %s131
    %s134 = sphi 0, %s133
    %s148 = sphi 0, %s134
    %s154 = sphi 0, %s156
    %s157 = sphi 0, %s154
    %s158 = sphi 0, %s157
    %s174 = sphi 0, %s158
    %s180 = sphi 0, %s182
    %s183 = sphi 0, %s180
    %s184 = sphi 0, %s183
    %s200 = sphi 0, %s184
  $region4: #{tpu_custom_call.1} parent=0 // loop_header_branch
    %16 = sbr.rel (%p14) target = $region8
  $region5: #{tpu_custom_call.1} parent=0 // loop_body
    %s18 = ssub.s32 %s13, 1
    %s19 = ssub.s32 %s13, 2
    %s20 = sadd.s32 %s13, 1
    %s21 = ssub.s32 %s13, %s20
    %p22 = scmp.eq.s32.totalorder %s21, 0
    %s24 = sadd.s32 %s23, 1
    %s25 = scalar_select %p22, %s23, %s24
    %p28 = pneg %p22
    %p29 = scmp.eq.s32.totalorder %s13, 1
    %p30 = por %p28, %p29
    %p31 = scmp.ne.s32.totalorder %s23, %s26
    %p32 = scmp.eq.s32.totalorder %s13, 0
    %p33 = por %p31, %p32
    %p34 = scmp.ne.s32.totalorder %s23, %s26
    %p35 = scmp.eq.s32.totalorder %s18, 1
    %p36 = por %p34, %p35
    %p37 = scmp.ne.s32.totalorder %s26, %s27
    %p38 = scmp.eq.s32.totalorder %s18, 0
    %p39 = por %p37, %p38
    %p40 = scmp.ne.s32.totalorder %s26, %s27
    %p41 = scmp.eq.s32.totalorder %s19, 1
    %p42 = por %p40, %p41
    %p44 = scmp.ne.s32.totalorder %s27, %s43
    %p45 = scmp.eq.s32.totalorder %s19, 0
    %p46 = por %p44, %p45
    %s48 = sadd.s32 %s47, 1
    %p51 = scmp.eq.s32.totalorder %s13, 1
    %p52 = scmp.ne.s32.totalorder %s47, %s49
    %p53 = scmp.eq.s32.totalorder %s13, 0
    %p54 = por %p52, %p53
    %p55 = scmp.ne.s32.totalorder %s47, %s49
    %p56 = scmp.eq.s32.totalorder %s18, 1
    %p57 = por %p55, %p56
    %p58 = scmp.ne.s32.totalorder %s49, %s50
    %p59 = scmp.eq.s32.totalorder %s18, 0
    %p60 = por %p58, %p59
    %p61 = scmp.ne.s32.totalorder %s49, %s50
    %p62 = scmp.eq.s32.totalorder %s19, 1
    %p63 = por %p61, %p62
    %p65 = scmp.ne.s32.totalorder %s50, %s64
    %p66 = scmp.eq.s32.totalorder %s19, 0
    %p67 = por %p65, %p66
    %s69 = sadd.s32 %s68, 1
    %p72 = scmp.eq.s32.totalorder %s13, 1
    %p73 = scmp.ne.s32.totalorder %s68, %s70
    %p74 = scmp.eq.s32.totalorder %s13, 0
    %p75 = por %p73, %p74
    %p76 = scmp.ne.s32.totalorder %s68, %s70
    %p77 = scmp.eq.s32.totalorder %s18, 1
    %p78 = por %p76, %p77
    %p79 = scmp.ne.s32.totalorder %s70, %s71
    %p80 = scmp.eq.s32.totalorder %s18, 0
    %p81 = por %p79, %p80
    %p82 = scmp.ne.s32.totalorder %s70, %s71
    %p83 = scmp.eq.s32.totalorder %s19, 1
    %p84 = por %p82, %p83
    %p86 = scmp.ne.s32.totalorder %s71, %s85
    %p87 = scmp.eq.s32.totalorder %s19, 0
    %p88 = por %p86, %p87
    %s90 = sadd.s32 %s89, 1
    %p93 = scmp.eq.s32.totalorder %s13, 1
    %p94 = scmp.ne.s32.totalorder %s89, %s91
    %p95 = scmp.eq.s32.totalorder %s13, 0
    %p96 = por %p94, %p95
    %p97 = scmp.ne.s32.totalorder %s89, %s91
    %p98 = scmp.eq.s32.totalorder %s18, 1
    %p99 = por %p97, %p98
    %p100 = scmp.ne.s32.totalorder %s91, %s92
    %p101 = scmp.eq.s32.totalorder %s18, 0
    %p102 = por %p100, %p101
    %p103 = scmp.ne.s32.totalorder %s91, %s92
    %p104 = scmp.eq.s32.totalorder %s19, 1
    %p105 = por %p103, %p104
    %p107 = scmp.ne.s32.totalorder %s92, %s106
    %p108 = scmp.eq.s32.totalorder %s19, 0
    %p109 = por %p107, %p108
    %s111 = sadd.s32 %s110, 1
    %p114 = scmp.eq.s32.totalorder %s13, 1
    %p115 = scmp.ne.s32.totalorder %s110, %s112
    %p116 = scmp.eq.s32.totalorder %s13, 0
    %p117 = por %p115, %p116
    %p118 = scmp.ne.s32.totalorder %s110, %s112
    %p119 = scmp.eq.s32.totalorder %s18, 1
    %p120 = por %p118, %p119
    %p121 = scmp.ne.s32.totalorder %s112, %s113
    %p122 = scmp.eq.s32.totalorder %s18, 0
    %p123 = por %p121, %p122
    %p124 = scmp.ne.s32.totalorder %s112, %s113
    %p125 = scmp.eq.s32.totalorder %s19, 1
    %p126 = por %p124, %p125
    %p128 = scmp.ne.s32.totalorder %s113, %s127
    %p129 = scmp.eq.s32.totalorder %s19, 0
    %p130 = por %p128, %p129
    %s132 = sadd.s32 %s131, 1
    %p135 = scmp.eq.s32.totalorder %s13, 1
    %p136 = scmp.ne.s32.totalorder %s131, %s133
    %p137 = scmp.eq.s32.totalorder %s13, 0
    %p138 = por %p136, %p137
    %p139 = scmp.ne.s32.totalorder %s131, %s133
    %p140 = scmp.eq.s32.totalorder %s18, 1
    %p141 = por %p139, %p140
    %p142 = scmp.ne.s32.totalorder %s133, %s134
    %p143 = scmp.eq.s32.totalorder %s18, 0
    %p144 = por %p142, %p143
    %p145 = scmp.ne.s32.totalorder %s133, %s134
    %p146 = scmp.eq.s32.totalorder %s19, 1
    %p147 = por %p145, %p146
    %p149 = scmp.ne.s32.totalorder %s134, %s148
    %p150 = scmp.eq.s32.totalorder %s19, 0
    %p151 = por %p149, %p150
    %s152 = ssub.s32 %s13, %s20
    %p153 = scmp.eq.s32.totalorder %s152, 0
    %s155 = sadd.s32 %s154, 1
    %s156 = scalar_select %p153, %s154, %s155
    %p159 = pneg %p153
    %p160 = scmp.eq.s32.totalorder %s13, 1
    %p161 = por %p159, %p160
    %p162 = scmp.ne.s32.totalorder %s154, %s157
    %p163 = scmp.eq.s32.totalorder %s13, 0
    %p164 = por %p162, %p163
    %p165 = scmp.ne.s32.totalorder %s154, %s157
    %p166 = scmp.eq.s32.totalorder %s18, 1
    %p167 = por %p165, %p166
    %p168 = scmp.ne.s32.totalorder %s157, %s158
    %p169 = scmp.eq.s32.totalorder %s18, 0
    %p170 = por %p168, %p169
    %p171 = scmp.ne.s32.totalorder %s157, %s158
    %p172 = scmp.eq.s32.totalorder %s19, 1
    %p173 = por %p171, %p172
    %p175 = scmp.ne.s32.totalorder %s158, %s174
    %p176 = scmp.eq.s32.totalorder %s19, 0
    %p177 = por %p175, %p176
    %s178 = ssub.s32 %s13, %s20
    %p179 = scmp.eq.s32.totalorder %s178, 0
    %s181 = sadd.s32 %s180, 1
    %s182 = scalar_select %p179, %s180, %s181
    %p185 = pneg %p179
    %p186 = scmp.eq.s32.totalorder %s13, 1
    %p187 = por %p185, %p186
    %p188 = scmp.ne.s32.totalorder %s180, %s183
    %p189 = scmp.eq.s32.totalorder %s13, 0
    %p190 = por %p188, %p189
    %p191 = scmp.ne.s32.totalorder %s180, %s183
    %p192 = scmp.eq.s32.totalorder %s18, 1
    %p193 = por %p191, %p192
    %p194 = scmp.ne.s32.totalorder %s183, %s184
    %p195 = scmp.eq.s32.totalorder %s18, 0
    %p196 = por %p194, %p195
    %p197 = scmp.ne.s32.totalorder %s183, %s184
    %p198 = scmp.eq.s32.totalorder %s19, 1
    %p199 = por %p197, %p198
    %p201 = scmp.ne.s32.totalorder %s184, %s200
    %p202 = scmp.eq.s32.totalorder %s19, 0
    %p203 = por %p201, %p202
    %p204 = scmp.le.s32.totalorder 1, %s13
    %p205 = scmp.lt.s32.totalorder %s13, 3
    %p206 = pnand %p204, %p205
    %p207 = pneg %p206
    // Predicated region
    $region9: #{tpu_custom_call.1} parent=5 // pred_check
      _
    $region10: #{tpu_custom_call.1} parent=5 // pred_check_branch
      %209 = sbr.rel (%p206) target = $region12
    $region11: #{tpu_custom_call.1} parent=5 // pred_region
      %s210 = ssub.s32 %s13, 1
      // Predicated region
      $region13: #{tpu_custom_call.1} parent=11 // pred_check
        %p211 = pneg %p60
      $region14: #{tpu_custom_call.1} parent=11 // pred_check_branch
        %213 = sbr.rel (%p211) target = $region16
      $region15: #{tpu_custom_call.1} parent=11 // pred_region
        _
      $region16: #{tpu_custom_call.1} parent=11 // pred_fallthru
        _
      // Predicated region
      $region17: #{tpu_custom_call.1} parent=11 // pred_check
        %p214 = pneg %p81
      $region18: #{tpu_custom_call.1} parent=11 // pred_check_branch
        %216 = sbr.rel (%p214) target = $region20
      $region19: #{tpu_custom_call.1} parent=11 // pred_region
        _
      $region20: #{tpu_custom_call.1} parent=11 // pred_fallthru
        _
      // Predicated region
      $region21: #{tpu_custom_call.1} parent=11 // pred_check
        %p217 = pneg %p102
      $region22: #{tpu_custom_call.1} parent=11 // pred_check_branch
        %219 = sbr.rel (%p217) target = $region24
      $region23: #{tpu_custom_call.1} parent=11 // pred_region
        _
      $region24: #{tpu_custom_call.1} parent=11 // pred_fallthru
        _
      // Predicated region
      $region25: #{tpu_custom_call.1} parent=11 // pred_check
        %p220 = pneg %p123
      $region26: #{tpu_custom_call.1} parent=11 // pred_check_branch
        %222 = sbr.rel (%p220) target = $region28
      $region27: #{tpu_custom_call.1} parent=11 // pred_region
        _
      $region28: #{tpu_custom_call.1} parent=11 // pred_fallthru
        _
      // Predicated region
      $region29: #{tpu_custom_call.1} parent=11 // pred_check
        %p223 = pneg %p144
      $region30: #{tpu_custom_call.1} parent=11 // pred_check_branch
        %225 = sbr.rel (%p223) target = $region32
      $region31: #{tpu_custom_call.1} parent=11 // pred_region
        _
      $region32: #{tpu_custom_call.1} parent=11 // pred_fallthru
        _
    $region12: #{tpu_custom_call.1} parent=5 // pred_fallthru
      _
    %p226 = scmp.lt.s32.totalorder %s13, 2
    // Predicated region
    $region33: #{tpu_custom_call.1} parent=5 // pred_check
      %p227 = pneg %p226
    $region34: #{tpu_custom_call.1} parent=5 // pred_check_branch
      %229 = sbr.rel (%p227) target = $region36
    $region35: #{tpu_custom_call.1} parent=5 // pred_region
      // Predicated region
      $region37: #{tpu_custom_call.1} parent=35 // pred_check
        %p230 = pneg %p33
      $region38: #{tpu_custom_call.1} parent=35 // pred_check_branch
        %232 = sbr.rel (%p230) target = $region40
      $region39: #{tpu_custom_call.1} parent=35 // pred_region
        %s233 = smul.u32 16, %s13
        %p234 = scmp.lt.s32.totalorder %s233, 31
        %s235 = scalar_select %p234, %s233, 31
        %s236 = smul.addr %s235, 8
        %s237 = scalar_lea.vmem %s0, %s236
        %s238 = smul.u32 16, %s13
      $region40: #{tpu_custom_call.1} parent=35 // pred_fallthru
        _
      // Predicated region
      $region41: #{tpu_custom_call.1} parent=35 // pred_check
        %p239 = pneg %p164
      $region42: #{tpu_custom_call.1} parent=35 // pred_check_branch
        %241 = sbr.rel (%p239) target = $region44
      $region43: #{tpu_custom_call.1} parent=35 // pred_region
        %s242 = smul.u32 16, %s13
        %p243 = scmp.lt.s32.totalorder %s242, 31
        %s244 = scalar_select %p243, %s242, 31
        %s245 = smul.addr %s244, 2
        %s246 = smul.addr %s245, 8
        %s247 = scalar_lea.vmem %s6, %s246
        %s248 = smul.u32 16, %s13
      $region44: #{tpu_custom_call.1} parent=35 // pred_fallthru
        _
    $region36: #{tpu_custom_call.1} parent=5 // pred_fallthru
      _
    %p249 = scmp.le.s32.totalorder 1, %s13
    %p250 = scmp.lt.s32.totalorder %s13, 3
    %p251 = pnand %p249, %p250
    %p252 = pneg %p251
    // Predicated region
    $region45: #{tpu_custom_call.1} parent=5 // pred_check
      _
    $region46: #{tpu_custom_call.1} parent=5 // pred_check_branch
      %254 = sbr.rel (%p251) target = $region48
    $region47: #{tpu_custom_call.1} parent=5 // pred_region
      %s255 = ssub.s32 %s13, 1
      %s256 = smul.u32 16, %s18
      %p257 = scmp.lt.s32.totalorder %s256, 31
      %s258 = scalar_select %p257, %s256, 31
      %s259 = smul.addr %s258, 8
      %s260 = scalar_lea.vmem %s0, %s259
      %p261 = pneg %p39
      %p262 = pneg %p36
      %p263 = pneg %p60
      %p264 = pneg %p57
      %p265 = pneg %p81
      %p266 = pneg %p78
      %p267 = pneg %p102
      %p268 = pneg %p99
      %p269 = pneg %p123
      %p270 = pneg %p120
      %p271 = pneg %p144
      %p272 = pneg %p141
      %s273 = smul.u32 16, %s18
      %p274 = scmp.lt.s32.totalorder %s273, 31
      %s275 = scalar_select %p274, %s273, 31
      %s276 = smul.addr %s275, 2
      %s277 = smul.addr %s276, 8
      %s278 = scalar_lea.vmem %s6, %s277
      %p279 = pneg %p170
      %p280 = pneg %p167
      %p281 = pneg %p196
      %p282 = pneg %p193
      %s283 = smul.u32 16, %s18
      %p284 = scmp.lt.s32.totalorder %s283, 31
      %s285 = scalar_select %p284, %s283, 31
      %s286 = smul.addr %s285, 8
      %s287 = scalar_lea.vmem %s7, %s286
      %s288 = smul.u32 16, %s18
      %p289 = scmp.lt.s32.totalorder %s288, 31
      %s290 = scalar_select %p289, %s288, 31
      %s291 = smul.addr %s290, 8
      %s292 = scalar_lea.vmem %s0, %s291
      %s293 = smul.u32 16, %s18
      %s294 = smul.u32 16, %s18
      %p295 = scmp.lt.s32.totalorder %s294, 31
      %s296 = scalar_select %p295, %s294, 31
      %s297 = smul.addr %s296, 2
      %s298 = smul.addr %s297, 8
      %s299 = scalar_lea.vmem %s6, %s298
      %s300 = smul.u32 16, %s18
      %s301 = smul.u32 16, %s18
      %p302 = scmp.lt.s32.totalorder %s301, 31
      %s303 = scalar_select %p302, %s301, 31
      %s304 = smul.addr %s303, 8
      %s305 = scalar_lea.vmem %s7, %s304
      %s306 = smul.u32 16, %s18
      %v307 = vld [vmem:[%s292] sm:$0xff]
      %v308 = vld [vmem:[%s292 + $0x8] sm:$0xff]
      %v309 = vld [vmem:[%s292 + $0x10] sm:$0xff]
      %v310 = vld [vmem:[%s292 + $0x18] sm:$0xff]
      %v311 = vld [vmem:[%s292 + $0x20] sm:$0xff]
      %v312 = vld [vmem:[%s292 + $0x28] sm:$0xff]
      %v313 = vld [vmem:[%s292 + $0x30] sm:$0xff]
      %v314 = vld [vmem:[%s292 + $0x38] sm:$0xff]
      %v315 = vld [vmem:[%s292 + $0x40] sm:$0xff]
      %v316 = vld [vmem:[%s292 + $0x48] sm:$0xff]
      %v317 = vld [vmem:[%s292 + $0x50] sm:$0xff]
      %v318 = vld [vmem:[%s292 + $0x58] sm:$0xff]
      %v319 = vld [vmem:[%s292 + $0x60] sm:$0xff]
      %v320 = vld [vmem:[%s292 + $0x68] sm:$0xff]
      %v321 = vld [vmem:[%s292 + $0x70] sm:$0xff]
      %v322 = vld [vmem:[%s292 + $0x78] sm:$0xff]
      %v323 = vld [vmem:[%s1] sm:$0xff]
      %v324 = vld [vmem:[%s1 + $0x8] sm:$0xff]
      %v325 = vld [vmem:[%s1 + $0x10] sm:$0xff]
      %v326 = vld [vmem:[%s1 + $0x18] sm:$0xff]
      %v327 = vld [vmem:[%s1 + $0x20] sm:$0xff]
      %v328 = vld [vmem:[%s1 + $0x28] sm:$0xff]
      %v329 = vld [vmem:[%s1 + $0x30] sm:$0xff]
      %v330 = vld [vmem:[%s1 + $0x38] sm:$0xff]
      %v331 = vld [vmem:[%s1 + $0x40] sm:$0xff]
      %v332 = vld [vmem:[%s1 + $0x48] sm:$0xff]
      %v333 = vld [vmem:[%s1 + $0x50] sm:$0xff]
      %v334 = vld [vmem:[%s1 + $0x58] sm:$0xff]
      %v335 = vld [vmem:[%s1 + $0x60] sm:$0xff]
      %v336 = vld [vmem:[%s1 + $0x68] sm:$0xff]
      %v337 = vld [vmem:[%s1 + $0x70] sm:$0xff]
      %v338 = vld [vmem:[%s1 + $0x78] sm:$0xff]
      %v339 = vld [vmem:[%s1 + $0x80] sm:$0xff]
      %v340 = vld [vmem:[%s1 + $0x88] sm:$0xff]
      %v341 = vld [vmem:[%s1 + $0x90] sm:$0xff]
      %v342 = vld [vmem:[%s1 + $0x98] sm:$0xff]
      %v343 = vld [vmem:[%s1 + $0xa0] sm:$0xff]
      %v344 = vld [vmem:[%s1 + $0xa8] sm:$0xff]
      %v345 = vld [vmem:[%s1 + $0xb0] sm:$0xff]
      %v346 = vld [vmem:[%s1 + $0xb8] sm:$0xff]
      %v347 = vld [vmem:[%s1 + $0xc0] sm:$0xff]
      %v348 = vld [vmem:[%s1 + $0xc8] sm:$0xff]
      %v349 = vld [vmem:[%s1 + $0xd0] sm:$0xff]
      %v350 = vld [vmem:[%s1 + $0xd8] sm:$0xff]
      %v351 = vld [vmem:[%s1 + $0xe0] sm:$0xff]
      %v352 = vld [vmem:[%s1 + $0xe8] sm:$0xff]
      %v353 = vld [vmem:[%s1 + $0xf0] sm:$0xff]
      %v354 = vld [vmem:[%s1 + $0xf8] sm:$0xff]
      %v355 = vld [vmem:[%s2] sm:$0x7]
      %v356 = vld [vmem:[%s3] sm:$0x1]
      %v358 = vlaneseq
      %v359 = vshrl.u32 %v358, 7
      %v360 = vsub.s32 0, %v359
      %v361 = vrot.slane %v356, %v360
      %vm363 = vcmask 23552
      %v365 = vsel %vm363, %v307, 0
      %v368 = vsel %vm363, %v308, 0
      %v371 = vsel %vm363, %v309, 0
      %v374 = vsel %vm363, %v310, 0
      %v377 = vsel %vm363, %v311, 0
      %v380 = vsel %vm363, %v312, 0
      %v383 = vsel %vm363, %v313, 0
      %v386 = vsel %vm363, %v314, 0
      %v389 = vsel %vm363, %v315, 0
      %v392 = vsel %vm363, %v316, 0
      %v395 = vsel %vm363, %v317, 0
      %v398 = vsel %vm363, %v318, 0
      %v401 = vsel %vm363, %v319, 0
      %v404 = vsel %vm363, %v320, 0
      %v407 = vsel %vm363, %v321, 0
      %v410 = vsel %vm363, %v322, 0
      %vm412 = vcmask 1042432
      %v414 = vsel %vm412, %v355, 0
      %416 = vmatprep.subr.mxu0 0.0
      %417 = vmatpush1.msra.mxu0 %v414
      %418 = vmatprep.subr.mxu0 0.0
      %419 = vmatpush1.msra.mxu0 0.0
      %420 = vmatprep.subr.mxu0 0.0
      %421 = vmatpush1.msra.mxu0 0.0
      %422 = vmatprep.subr.mxu0 0.0
      %423 = vmatpush1.msra.mxu0 0.0
      %424 = vmatprep.subr.mxu0 0.0
      %425 = vmatpush1.msra.mxu0 0.0
      %426 = vmatprep.subr.mxu0 0.0
      %427 = vmatpush1.msra.mxu0 0.0
      %428 = vmatprep.subr.mxu0 0.0
      %429 = vmatpush1.msra.mxu0 0.0
      %430 = vmatprep.subr.mxu0 0.0
      %431 = vmatpush1.msra.mxu0 0.0
      %432 = vmatprep.subr.mxu0 0.0
      %433 = vmatpush1.msra.mxu0 0.0
      %434 = vmatprep.subr.mxu0 0.0
      %435 = vmatpush1.msra.mxu0 0.0
      %436 = vmatprep.subr.mxu0 0.0
      %437 = vmatpush1.msra.mxu0 0.0
      %438 = vmatprep.subr.mxu0 0.0
      %439 = vmatpush1.msra.mxu0 0.0
      %440 = vmatprep.subr.mxu0 0.0
      %441 = vmatpush1.msra.mxu0 0.0
      %442 = vmatprep.subr.mxu0 0.0
      %443 = vmatpush1.msra.mxu0 0.0
      %444 = vmatprep.subr.mxu0 0.0
      %445 = vmatpush1.msra.mxu0 0.0
      %446 = vmatprep.subr.mxu0 0.0
      %447 = vmatpush1.msra.mxu0 0.0
      %448 = vmatprep.subr.mxu0 0.0
      %449 = vmatpush1.msra.mxu0 0.0
      %450 = vmatprep.subr.mxu0 0.0
      %451 = vmatpush1.msra.mxu0 0.0
      %452 = vmatprep.subr.mxu0 0.0
      %453 = vmatpush1.msra.mxu0 0.0
      %454 = vmatprep.subr.mxu0 0.0
      %455 = vmatpush1.msra.mxu0 0.0
      %456 = vmatprep.subr.mxu0 0.0
      %457 = vmatpush1.msra.mxu0 0.0
      %458 = vmatprep.subr.mxu0 0.0
      %459 = vmatpush1.msra.mxu0 0.0
      %460 = vmatprep.subr.mxu0 0.0
      %461 = vmatpush1.msra.mxu0 0.0
      %462 = vmatprep.subr.mxu0 0.0
      %463 = vmatpush1.msra.mxu0 0.0
      %464 = vmatprep.subr.mxu0 0.0
      %465 = vmatpush1.msra.mxu0 0.0
      %466 = vmatprep.subr.mxu0 0.0
      %467 = vmatpush1.msra.mxu0 0.0
      %468 = vmatprep.subr.mxu0 0.0
      %469 = vmatpush1.msra.mxu0 0.0
      %470 = vmatprep.subr.mxu0 0.0
      %471 = vmatpush1.msra.mxu0 0.0
      %472 = vmatprep.subr.mxu0 0.0
      %473 = vmatpush1.msra.mxu0 0.0
      %474 = vmatprep.subr.mxu0 0.0
      %475 = vmatpush1.msra.mxu0 0.0
      %476 = vmatprep.subr.mxu0 0.0
      %477 = vmatpush1.msra.mxu0 0.0
      %478 = vmatprep.subr.mxu0 0.0
      %479 = vmatpush1.msra.mxu0 0.0
      %480 = vmatprep.mubr.f32.mxu0 0.0
      %481 = vmatmul.mubr.f32.gmra.mrb[0].mxu0 %v365
      %v482 = vpop.f32.mrb[0].mxu0
      %v483 = vadd.f32 %v361, %v482
      %v484 = vpop.f32.mrb[0].mxu0
      %485 = vmatprep.mubr.f32.mxu0 0.0
      %486 = vmatmul.mubr.f32.gmra.mrb[0].mxu0 %v368
      %v487 = vpop.f32.mrb[0].mxu0
      %v488 = vadd.f32 %v361, %v487
      %v489 = vpop.f32.mrb[0].mxu0
      %490 = vmatprep.mubr.f32.mxu0 0.0
      %491 = vmatmul.mubr.f32.gmra.mrb[0].mxu0 %v371
      %v492 = vpop.f32.mrb[0].mxu0
      %v493 = vadd.f32 %v361, %v492
      %v494 = vpop.f32.mrb[0].mxu0
      %495 = vmatprep.mubr.f32.mxu0 0.0
      %496 = vmatmul.mubr.f32.gmra.mrb[0].mxu0 %v374
      %v497 = vpop.f32.mrb[0].mxu0
      %v498 = vadd.f32 %v361, %v497
      %v499 = vpop.f32.mrb[0].mxu0
      %500 = vmatprep.mubr.f32.mxu0 0.0
      %501 = vmatmul.mubr.f32.gmra.mrb[0].mxu0 %v377
      %v502 = vpop.f32.mrb[0].mxu0
      %v503 = vadd.f32 %v361, %v502
      %v504 = vpop.f32.mrb[0].mxu0
      %505 = vmatprep.mubr.f32.mxu0 0.0
      %506 = vmatmul.mubr.f32.gmra.mrb[0].mxu0 %v380
      %v507 = vpop.f32.mrb[0].mxu0
      %v508 = vadd.f32 %v361, %v507
      %v509 = vpop.f32.mrb[0].mxu0
      %510 = vmatprep.mubr.f32.mxu0 0.0
      %511 = vmatmul.mubr.f32.gmra.mrb[0].mxu0 %v383
      %v512 = vpop.f32.mrb[0].mxu0
      %v513 = vadd.f32 %v361, %v512
      %v514 = vpop.f32.mrb[0].mxu0
      %515 = vmatprep.mubr.f32.mxu0 0.0
      %516 = vmatmul.mubr.f32.gmra.mrb[0].mxu0 %v386
      %v517 = vpop.f32.mrb[0].mxu0
      %v518 = vadd.f32 %v361, %v517
      %v519 = vpop.f32.mrb[0].mxu0
      %520 = vmatprep.mubr.f32.mxu0 0.0
      %521 = vmatmul.mubr.f32.gmra.mrb[0].mxu0 %v389
      %v522 = vpop.f32.mrb[0].mxu0
      %v523 = vadd.f32 %v361, %v522
      %v524 = vpop.f32.mrb[0].mxu0
      %525 = vmatprep.mubr.f32.mxu0 0.0
      %526 = vmatmul.mubr.f32.gmra.mrb[0].mxu0 %v392
      %v527 = vpop.f32.mrb[0].mxu0
      %v528 = vadd.f32 %v361, %v527
      %v529 = vpop.f32.mrb[0].mxu0
      %530 = vmatprep.mubr.f32.mxu0 0.0
      %531 = vmatmul.mubr.f32.gmra.mrb[0].mxu0 %v395
      %v532 = vpop.f32.mrb[0].mxu0
      %v533 = vadd.f32 %v361, %v532
      %v534 = vpop.f32.mrb[0].mxu0
      %535 = vmatprep.mubr.f32.mxu0 0.0
      %536 = vmatmul.mubr.f32.gmra.mrb[0].mxu0 %v398
      %v537 = vpop.f32.mrb[0].mxu0
      %v538 = vadd.f32 %v361, %v537
      %v539 = vpop.f32.mrb[0].mxu0
      %540 = vmatprep.mubr.f32.mxu0 0.0
      %541 = vmatmul.mubr.f32.gmra.mrb[0].mxu0 %v401
      %v542 = vpop.f32.mrb[0].mxu0
      %v543 = vadd.f32 %v361, %v542
      %v544 = vpop.f32.mrb[0].mxu0
      %545 = vmatprep.mubr.f32.mxu0 0.0
      %546 = vmatmul.mubr.f32.gmra.mrb[0].mxu0 %v404
      %v547 = vpop.f32.mrb[0].mxu0
      %v548 = vadd.f32 %v361, %v547
      %v549 = vpop.f32.mrb[0].mxu0
      %550 = vmatprep.mubr.f32.mxu0 0.0
      %551 = vmatmul.mubr.f32.gmra.mrb[0].mxu0 %v407
      %v552 = vpop.f32.mrb[0].mxu0
      %v553 = vadd.f32 %v361, %v552
      %v554 = vpop.f32.mrb[0].mxu0
      %555 = vmatprep.mubr.f32.mxu0 0.0
      %556 = vmatmul.mubr.f32.gmra.mrb[0].mxu0 %v410
      %v557 = vpop.f32.mrb[0].mxu0
      %v558 = vadd.f32 %v361, %v557
      %v559 = vpop.f32.mrb[0].mxu0
      %560 = vdwg.mxu0
      %v561 = vld [vmem:[%s4] sm:$0x7]
      %v562 = vld [vmem:[%s5] sm:$0x1]
      %v564 = vlaneseq
      %v565 = vshrl.u32 %v564, 7
      %v566 = vsub.s32 0, %v565
      %v567 = vrot.slane %v562, %v566
      %v570 = vsel %vm363, %v323, 0
      %v573 = vsel %vm363, %v324, 0
      %v576 = vsel %vm363, %v325, 0
      %v579 = vsel %vm363, %v326, 0
      %v582 = vsel %vm363, %v327, 0
      %v585 = vsel %vm363, %v328, 0
      %v588 = vsel %vm363, %v329, 0
      %v591 = vsel %vm363, %v330, 0
      %v594 = vsel %vm363, %v331, 0
      %v597 = vsel %vm363, %v332, 0
      %v600 = vsel %vm363, %v333, 0
      %v603 = vsel %vm363, %v334, 0
      %v606 = vsel %vm363, %v335, 0
      %v609 = vsel %vm363, %v336, 0
      %v612 = vsel %vm363, %v337, 0
      %v615 = vsel %vm363, %v338, 0
      %v618 = vsel %vm363, %v339, 0
      %v621 = vsel %vm363, %v340, 0
      %v624 = vsel %vm363, %v341, 0
      %v627 = vsel %vm363, %v342, 0
      %v630 = vsel %vm363, %v343, 0
      %v633 = vsel %vm363, %v344, 0
      %v636 = vsel %vm363, %v345, 0
      %v639 = vsel %vm363, %v346, 0
      %v642 = vsel %vm363, %v347, 0
      %v645 = vsel %vm363, %v348, 0
      %v648 = vsel %vm363, %v349, 0
      %v651 = vsel %vm363, %v350, 0
      %v654 = vsel %vm363, %v351, 0
      %v657 = vsel %vm363, %v352, 0
      %v660 = vsel %vm363, %v353, 0
      %v663 = vsel %vm363, %v354, 0
      %v666 = vsel %vm412, %v561, 0
      %668 = vmatprep.subr.mxu0 0.0
      %669 = vmatpush1.msra.mxu0 %v666
      %670 = vmatprep.subr.mxu0 0.0
      %671 = vmatpush1.msra.mxu0 0.0
      %672 = vmatprep.subr.mxu0 0.0
      %673 = vmatpush1.msra.mxu0 0.0
      %674 = vmatprep.subr.mxu0 0.0
      %675 = vmatpush1.msra.mxu0 0.0
      %676 = vmatprep.subr.mxu0 0.0
      %677 = vmatpush1.msra.mxu0 0.0
      %678 = vmatprep.subr.mxu0 0.0
      %679 = vmatpush1.msra.mxu0 0.0
      %680 = vmatprep.subr.mxu0 0.0
      %681 = vmatpush1.msra.mxu0 0.0
      %682 = vmatprep.subr.mxu0 0.0
      %683 = vmatpush1.msra.mxu0 0.0
      %684 = vmatprep.subr.mxu0 0.0
      %685 = vmatpush1.msra.mxu0 0.0
      %686 = vmatprep.subr.mxu0 0.0
      %687 = vmatpush1.msra.mxu0 0.0
      %688 = vmatprep.subr.mxu0 0.0
      %689 = vmatpush1.msra.mxu0 0.0
      %690 = vmatprep.subr.mxu0 0.0
      %691 = vmatpush1.msra.mxu0 0.0
      %692 = vmatprep.subr.mxu0 0.0
      %693 = vmatpush1.msra.mxu0 0.0
      %694 = vmatprep.subr.mxu0 0.0
      %695 = vmatpush1.msra.mxu0 0.0
      %696 = vmatprep.subr.mxu0 0.0
      %697 = vmatpush1.msra.mxu0 0.0
      %698 = vmatprep.subr.mxu0 0.0
      %699 = vmatpush1.msra.mxu0 0.0
      %700 = vmatprep.subr.mxu0 0.0
      %701 = vmatpush1.msra.mxu0 0.0
      %702 = vmatprep.subr.mxu0 0.0
      %703 = vmatpush1.msra.mxu0 0.0
      %704 = vmatprep.subr.mxu0 0.0
      %705 = vmatpush1.msra.mxu0 0.0
      %706 = vmatprep.subr.mxu0 0.0
      %707 = vmatpush1.msra.mxu0 0.0
      %708 = vmatprep.subr.mxu0 0.0
      %709 = vmatpush1.msra.mxu0 0.0
      %710 = vmatprep.subr.mxu0 0.0
      %711 = vmatpush1.msra.mxu0 0.0
      %712 = vmatprep.subr.mxu0 0.0
      %713 = vmatpush1.msra.mxu0 0.0
      %714 = vmatprep.subr.mxu0 0.0
      %715 = vmatpush1.msra.mxu0 0.0
      %716 = vmatprep.subr.mxu0 0.0
      %717 = vmatpush1.msra.mxu0 0.0
      %718 = vmatprep.subr.mxu0 0.0
      %719 = vmatpush1.msra.mxu0 0.0
      %720 = vmatprep.subr.mxu0 0.0
      %721 = vmatpush1.msra.mxu0 0.0
      %722 = vmatprep.subr.mxu0 0.0
      %723 = vmatpush1.msra.mxu0 0.0
      %724 = vmatprep.subr.mxu0 0.0
      %725 = vmatpush1.msra.mxu0 0.0
      %726 = vmatprep.subr.mxu0 0.0
      %727 = vmatpush1.msra.mxu0 0.0
      %728 = vmatprep.subr.mxu0 0.0
      %729 = vmatpush1.msra.mxu0 0.0
      %730 = vmatprep.subr.mxu0 0.0
      %731 = vmatpush1.msra.mxu0 0.0
      %732 = vmatprep.mubr.f32.mxu0 0.0
      %733 = vmatmul.mubr.f32.gmra.mrb[0].mxu0 %v570
      %v734 = vpop.f32.mrb[0].mxu0
      %v735 = vadd.f32 %v567, %v734
      %v736 = vpop.f32.mrb[0].mxu0
      %737 = vmatprep.mubr.f32.mxu0 0.0
      %738 = vmatmul.mubr.f32.gmra.mrb[0].mxu0 %v573
      %v739 = vpop.f32.mrb[0].mxu0
      %v740 = vadd.f32 %v567, %v739
      %v741 = vpop.f32.mrb[0].mxu0
      %742 = vmatprep.mubr.f32.mxu0 0.0
      %743 = vmatmul.mubr.f32.gmra.mrb[0].mxu0 %v576
      %v744 = vpop.f32.mrb[0].mxu0
      %v745 = vadd.f32 %v567, %v744
      %v746 = vpop.f32.mrb[0].mxu0
      %747 = vmatprep.mubr.f32.mxu0 0.0
      %748 = vmatmul.mubr.f32.gmra.mrb[0].mxu0 %v579
      %v749 = vpop.f32.mrb[0].mxu0
      %v750 = vadd.f32 %v567, %v749
      %v751 = vpop.f32.mrb[0].mxu0
      %752 = vmatprep.mubr.f32.mxu0 0.0
      %753 = vmatmul.mubr.f32.gmra.mrb[0].mxu0 %v582
      %v754 = vpop.f32.mrb[0].mxu0
      %v755 = vadd.f32 %v567, %v754
      %v756 = vpop.f32.mrb[0].mxu0
      %757 = vmatprep.mubr.f32.mxu0 0.0
      %758 = vmatmul.mubr.f32.gmra.mrb[0].mxu0 %v585
      %v759 = vpop.f32.mrb[0].mxu0
      %v760 = vadd.f32 %v567, %v759
      %v761 = vpop.f32.mrb[0].mxu0
      %762 = vmatprep.mubr.f32.mxu0 0.0
      %763 = vmatmul.mubr.f32.gmra.mrb[0].mxu0 %v588
      %v764 = vpop.f32.mrb[0].mxu0
      %v765 = vadd.f32 %v567, %v764
      %v766 = vpop.f32.mrb[0].mxu0
      %767 = vmatprep.mubr.f32.mxu0 0.0
      %768 = vmatmul.mubr.f32.gmra.mrb[0].mxu0 %v591
      %v769 = vpop.f32.mrb[0].mxu0
      %v770 = vadd.f32 %v567, %v769
      %v771 = vpop.f32.mrb[0].mxu0
      %772 = vmatprep.mubr.f32.mxu0 0.0
      %773 = vmatmul.mubr.f32.gmra.mrb[0].mxu0 %v594
      %v774 = vpop.f32.mrb[0].mxu0
      %v775 = vadd.f32 %v567, %v774
      %v776 = vpop.f32.mrb[0].mxu0
      %777 = vmatprep.mubr.f32.mxu0 0.0
      %778 = vmatmul.mubr.f32.gmra.mrb[0].mxu0 %v597
      %v779 = vpop.f32.mrb[0].mxu0
      %v780 = vadd.f32 %v567, %v779
      %v781 = vpop.f32.mrb[0].mxu0
      %782 = vmatprep.mubr.f32.mxu0 0.0
      %783 = vmatmul.mubr.f32.gmra.mrb[0].mxu0 %v600
      %v784 = vpop.f32.mrb[0].mxu0
      %v785 = vadd.f32 %v567, %v784
      %v786 = vpop.f32.mrb[0].mxu0
      %787 = vmatprep.mubr.f32.mxu0 0.0
      %788 = vmatmul.mubr.f32.gmra.mrb[0].mxu0 %v603
      %v789 = vpop.f32.mrb[0].mxu0
      %v790 = vadd.f32 %v567, %v789
      %v791 = vpop.f32.mrb[0].mxu0
      %792 = vmatprep.mubr.f32.mxu0 0.0
      %793 = vmatmul.mubr.f32.gmra.mrb[0].mxu0 %v606
      %v794 = vpop.f32.mrb[0].mxu0
      %v795 = vadd.f32 %v567, %v794
      %v796 = vpop.f32.mrb[0].mxu0
      %797 = vmatprep.mubr.f32.mxu0 0.0
      %798 = vmatmul.mubr.f32.gmra.mrb[0].mxu0 %v609
      %v799 = vpop.f32.mrb[0].mxu0
      %v800 = vadd.f32 %v567, %v799
      %v801 = vpop.f32.mrb[0].mxu0
      %802 = vmatprep.mubr.f32.mxu0 0.0
      %803 = vmatmul.mubr.f32.gmra.mrb[0].mxu0 %v612
      %v804 = vpop.f32.mrb[0].mxu0
      %v805 = vadd.f32 %v567, %v804
      %v806 = vpop.f32.mrb[0].mxu0
      %807 = vmatprep.mubr.f32.mxu0 0.0
      %808 = vmatmul.mubr.f32.gmra.mrb[0].mxu0 %v615
      %v809 = vpop.f32.mrb[0].mxu0
      %v810 = vadd.f32 %v567, %v809
      %v811 = vpop.f32.mrb[0].mxu0
      %812 = vmatprep.mubr.f32.mxu0 0.0
      %813 = vmatmul.mubr.f32.gmra.mrb[0].mxu0 %v618
      %v814 = vpop.f32.mrb[0].mxu0
      %v815 = vadd.f32 %v567, %v814
      %v816 = vpop.f32.mrb[0].mxu0
      %817 = vmatprep.mubr.f32.mxu0 0.0
      %818 = vmatmul.mubr.f32.gmra.mrb[0].mxu0 %v621
      %v819 = vpop.f32.mrb[0].mxu0
      %v820 = vadd.f32 %v567, %v819
      %v821 = vpop.f32.mrb[0].mxu0
      %822 = vmatprep.mubr.f32.mxu0 0.0
      %823 = vmatmul.mubr.f32.gmra.mrb[0].mxu0 %v624
      %v824 = vpop.f32.mrb[0].mxu0
      %v825 = vadd.f32 %v567, %v824
      %v826 = vpop.f32.mrb[0].mxu0
      %827 = vmatprep.mubr.f32.mxu0 0.0
      %828 = vmatmul.mubr.f32.gmra.mrb[0].mxu0 %v627
      %v829 = vpop.f32.mrb[0].mxu0
      %v830 = vadd.f32 %v567, %v829
      %v831 = vpop.f32.mrb[0].mxu0
      %832 = vmatprep.mubr.f32.mxu0 0.0
      %833 = vmatmul.mubr.f32.gmra.mrb[0].mxu0 %v630
      %v834 = vpop.f32.mrb[0].mxu0
      %v835 = vadd.f32 %v567, %v834
      %v836 = vpop.f32.mrb[0].mxu0
      %837 = vmatprep.mubr.f32.mxu0 0.0
      %838 = vmatmul.mubr.f32.gmra.mrb[0].mxu0 %v633
      %v839 = vpop.f32.mrb[0].mxu0
      %v840 = vadd.f32 %v567, %v839
      %v841 = vpop.f32.mrb[0].mxu0
      %842 = vmatprep.mubr.f32.mxu0 0.0
      %843 = vmatmul.mubr.f32.gmra.mrb[0].mxu0 %v636
      %v844 = vpop.f32.mrb[0].mxu0
      %v845 = vadd.f32 %v567, %v844
      %v846 = vpop.f32.mrb[0].mxu0
      %847 = vmatprep.mubr.f32.mxu0 0.0
      %848 = vmatmul.mubr.f32.gmra.mrb[0].mxu0 %v639
      %v849 = vpop.f32.mrb[0].mxu0
      %v850 = vadd.f32 %v567, %v849
      %v851 = vpop.f32.mrb[0].mxu0
      %852 = vmatprep.mubr.f32.mxu0 0.0
      %853 = vmatmul.mubr.f32.gmra.mrb[0].mxu0 %v642
      %v854 = vpop.f32.mrb[0].mxu0
      %v855 = vadd.f32 %v567, %v854
      %v856 = vpop.f32.mrb[0].mxu0
      %857 = vmatprep.mubr.f32.mxu0 0.0
      %858 = vmatmul.mubr.f32.gmra.mrb[0].mxu0 %v645
      %v859 = vpop.f32.mrb[0].mxu0
      %v860 = vadd.f32 %v567, %v859
      %v861 = vpop.f32.mrb[0].mxu0
      %862 = vmatprep.mubr.f32.mxu0 0.0
      %863 = vmatmul.mubr.f32.gmra.mrb[0].mxu0 %v648
      %v864 = vpop.f32.mrb[0].mxu0
      %v865 = vadd.f32 %v567, %v864
      %v866 = vpop.f32.mrb[0].mxu0
      %867 = vmatprep.mubr.f32.mxu0 0.0
      %868 = vmatmul.mubr.f32.gmra.mrb[0].mxu0 %v651
      %v869 = vpop.f32.mrb[0].mxu0
      %v870 = vadd.f32 %v567, %v869
      %v871 = vpop.f32.mrb[0].mxu0
      %872 = vmatprep.mubr.f32.mxu0 0.0
      %873 = vmatmul.mubr.f32.gmra.mrb[0].mxu0 %v654
      %v874 = vpop.f32.mrb[0].mxu0
      %v875 = vadd.f32 %v567, %v874
      %v876 = vpop.f32.mrb[0].mxu0
      %877 = vmatprep.mubr.f32.mxu0 0.0
      %878 = vmatmul.mubr.f32.gmra.mrb[0].mxu0 %v657
      %v879 = vpop.f32.mrb[0].mxu0
      %v880 = vadd.f32 %v567, %v879
      %v881 = vpop.f32.mrb[0].mxu0
      %882 = vmatprep.mubr.f32.mxu0 0.0
      %883 = vmatmul.mubr.f32.gmra.mrb[0].mxu0 %v660
      %v884 = vpop.f32.mrb[0].mxu0
      %v885 = vadd.f32 %v567, %v884
      %v886 = vpop.f32.mrb[0].mxu0
      %887 = vmatprep.mubr.f32.mxu0 0.0
      %888 = vmatmul.mubr.f32.gmra.mrb[0].mxu0 %v663
      %v889 = vpop.f32.mrb[0].mxu0
      %v890 = vadd.f32 %v567, %v889
      %v891 = vpop.f32.mrb[0].mxu0
      %892 = vdwg.mxu0
      %vm893 = vcmask 64512
      %v895 = vsel %vm893, %v483, 0
      %v898 = vsel %vm893, %v488, 0
      %v901 = vsel %vm893, %v493, 0
      %v904 = vsel %vm893, %v498, 0
      %v907 = vsel %vm893, %v503, 0
      %v910 = vsel %vm893, %v508, 0
      %v913 = vsel %vm893, %v513, 0
      %v916 = vsel %vm893, %v518, 0
      %v919 = vsel %vm893, %v523, 0
      %v922 = vsel %vm893, %v528, 0
      %v925 = vsel %vm893, %v533, 0
      %v928 = vsel %vm893, %v538, 0
      %v931 = vsel %vm893, %v543, 0
      %v934 = vsel %vm893, %v548, 0
      %v937 = vsel %vm893, %v553, 0
      %v940 = vsel %vm893, %v558, 0
      %v943 = vsel %vm893, %v735, 0
      %v946 = vsel %vm893, %v740, 0
      %v949 = vsel %vm893, %v745, 0
      %v952 = vsel %vm893, %v750, 0
      %v955 = vsel %vm893, %v755, 0
      %v958 = vsel %vm893, %v760, 0
      %v961 = vsel %vm893, %v765, 0
      %v964 = vsel %vm893, %v770, 0
      %v967 = vsel %vm893, %v775, 0
      %v970 = vsel %vm893, %v780, 0
      %v973 = vsel %vm893, %v785, 0
      %v976 = vsel %vm893, %v790, 0
      %v979 = vsel %vm893, %v795, 0
      %v982 = vsel %vm893, %v800, 0
      %v985 = vsel %vm893, %v805, 0
      %v988 = vsel %vm893, %v810, 0
      %v991 = vsel %vm893, %v815, 0
      %v994 = vsel %vm893, %v820, 0
      %v997 = vsel %vm893, %v825, 0
      %v1000 = vsel %vm893, %v830, 0
      %v1003 = vsel %vm893, %v835, 0
      %v1006 = vsel %vm893, %v840, 0
      %v1009 = vsel %vm893, %v845, 0
      %v1012 = vsel %vm893, %v850, 0
      %v1015 = vsel %vm893, %v855, 0
      %v1018 = vsel %vm893, %v860, 0
      %v1021 = vsel %vm893, %v865, 0
      %v1024 = vsel %vm893, %v870, 0
      %v1027 = vsel %vm893, %v875, 0
      %v1030 = vsel %vm893, %v880, 0
      %v1033 = vsel %vm893, %v885, 0
      %v1036 = vsel %vm893, %v890, 0
      %1038 = vmatprep.subr.mxu0 0.0
      %1039 = vmatpush1.xpose.msra.mxu0 %v943
      %1040 = vmatprep.subr.mxu0 0.0
      %1041 = vmatpush1.xpose.msra.mxu0 %v946
      %1042 = vmatprep.subr.mxu0 0.0
      %1043 = vmatpush1.xpose.msra.mxu0 %v949
      %1044 = vmatprep.subr.mxu0 0.0
      %1045 = vmatpush1.xpose.msra.mxu0 %v952
      %1046 = vmatprep.subr.mxu0 0.0
      %1047 = vmatpush1.xpose.msra.mxu0 %v955
      %1048 = vmatprep.subr.mxu0 0.0
      %1049 = vmatpush1.xpose.msra.mxu0 %v958
      %1050 = vmatprep.subr.mxu0 0.0
      %1051 = vmatpush1.xpose.msra.mxu0 %v961
      %1052 = vmatprep.subr.mxu0 0.0
      %1053 = vmatpush1.xpose.msra.mxu0 %v964
      %1054 = vmatprep.subr.mxu0 0.0
      %1055 = vmatpush1.xpose.msra.mxu0 %v967
      %1056 = vmatprep.subr.mxu0 0.0
      %1057 = vmatpush1.xpose.msra.mxu0 %v970
      %1058 = vmatprep.subr.mxu0 0.0
      %1059 = vmatpush1.xpose.msra.mxu0 %v973
      %1060 = vmatprep.subr.mxu0 0.0
      %1061 = vmatpush1.xpose.msra.mxu0 %v976
      %1062 = vmatprep.subr.mxu0 0.0
      %1063 = vmatpush1.xpose.msra.mxu0 %v979
      %1064 = vmatprep.subr.mxu0 0.0
      %1065 = vmatpush1.xpose.msra.mxu0 %v982
      %1066 = vmatprep.subr.mxu0 0.0
      %1067 = vmatpush1.xpose.msra.mxu0 %v985
      %1068 = vmatprep.subr.mxu0 0.0
      %1069 = vmatpush1.xpose.msra.mxu0 %v988
      %1070 = vmatprep.subr.mxu0 0.0
      %1071 = vmatpush1.xpose.msra.mxu0 %v991
      %1072 = vmatprep.subr.mxu0 0.0
      %1073 = vmatpush1.xpose.msra.mxu0 %v994
      %1074 = vmatprep.subr.mxu0 0.0
      %1075 = vmatpush1.xpose.msra.mxu0 %v997
      %1076 = vmatprep.subr.mxu0 0.0
      %1077 = vmatpush1.xpose.msra.mxu0 %v1000
      %1078 = vmatprep.subr.mxu0 0.0
      %1079 = vmatpush1.xpose.msra.mxu0 %v1003
      %1080 = vmatprep.subr.mxu0 0.0
      %1081 = vmatpush1.xpose.msra.mxu0 %v1006
      %1082 = vmatprep.subr.mxu0 0.0
      %1083 = vmatpush1.xpose.msra.mxu0 %v1009
      %1084 = vmatprep.subr.mxu0 0.0
      %1085 = vmatpush1.xpose.msra.mxu0 %v1012
      %1086 = vmatprep.subr.mxu0 0.0
      %1087 = vmatpush1.xpose.msra.mxu0 %v1015
      %1088 = vmatprep.subr.mxu0 0.0
      %1089 = vmatpush1.xpose.msra.mxu0 %v1018
      %1090 = vmatprep.subr.mxu0 0.0
      %1091 = vmatpush1.xpose.msra.mxu0 %v1021
      %1092 = vmatprep.subr.mxu0 0.0
      %1093 = vmatpush1.xpose.msra.mxu0 %v1024
      %1094 = vmatprep.subr.mxu0 0.0
      %1095 = vmatpush1.xpose.msra.mxu0 %v1027
      %1096 = vmatprep.subr.mxu0 0.0
      %1097 = vmatpush1.xpose.msra.mxu0 %v1030
      %1098 = vmatprep.subr.mxu0 0.0
      %1099 = vmatpush1.xpose.msra.mxu0 %v1033
      %1100 = vmatprep.subr.mxu0 0.0
      %1101 = vmatpush1.xpose.msra.mxu0 %v1036
      %1102 = vmatprep.mubr.f32.mxu0 0.0
      %1103 = vmatmul.mubr.f32.gmra.mrb[0].mxu0 %v895
      %v1104 = vpop.f32.mrb[0].mxu0
      %v1105 = vadd.f32 0.0, %v1104
      %v1106 = vpop.f32.mrb[0].mxu0
      %v1107 = vadd.f32 0.0, %v1106
      %1108 = vmatprep.mubr.f32.mxu0 0.0
      %1109 = vmatmul.mubr.f32.gmra.mrb[0].mxu0 %v898
      %v1110 = vpop.f32.mrb[0].mxu0
      %v1111 = vadd.f32 0.0, %v1110
      %v1112 = vpop.f32.mrb[0].mxu0
      %v1113 = vadd.f32 0.0, %v1112
      %1114 = vmatprep.mubr.f32.mxu0 0.0
      %1115 = vmatmul.mubr.f32.gmra.mrb[0].mxu0 %v901
      %v1116 = vpop.f32.mrb[0].mxu0
      %v1117 = vadd.f32 0.0, %v1116
      %v1118 = vpop.f32.mrb[0].mxu0
      %v1119 = vadd.f32 0.0, %v1118
      %1120 = vmatprep.mubr.f32.mxu0 0.0
      %1121 = vmatmul.mubr.f32.gmra.mrb[0].mxu0 %v904
      %v1122 = vpop.f32.mrb[0].mxu0
      %v1123 = vadd.f32 0.0, %v1122
      %v1124 = vpop.f32.mrb[0].mxu0
      %v1125 = vadd.f32 0.0, %v1124
      %1126 = vmatprep.mubr.f32.mxu0 0.0
      %1127 = vmatmul.mubr.f32.gmra.mrb[0].mxu0 %v907
      %v1128 = vpop.f32.mrb[0].mxu0
      %v1129 = vadd.f32 0.0, %v1128
      %v1130 = vpop.f32.mrb[0].mxu0
      %v1131 = vadd.f32 0.0, %v1130
      %1132 = vmatprep.mubr.f32.mxu0 0.0
      %1133 = vmatmul.mubr.f32.gmra.mrb[0].mxu0 %v910
      %v1134 = vpop.f32.mrb[0].mxu0
      %v1135 = vadd.f32 0.0, %v1134
      %v1136 = vpop.f32.mrb[0].mxu0
      %v1137 = vadd.f32 0.0, %v1136
      %1138 = vmatprep.mubr.f32.mxu0 0.0
      %1139 = vmatmul.mubr.f32.gmra.mrb[0].mxu0 %v913
      %v1140 = vpop.f32.mrb[0].mxu0
      %v1141 = vadd.f32 0.0, %v1140
      %v1142 = vpop.f32.mrb[0].mxu0
      %v1143 = vadd.f32 0.0, %v1142
      %1144 = vmatprep.mubr.f32.mxu0 0.0
      %1145 = vmatmul.mubr.f32.gmra.mrb[0].mxu0 %v916
      %v1146 = vpop.f32.mrb[0].mxu0
      %v1147 = vadd.f32 0.0, %v1146
      %v1148 = vpop.f32.mrb[0].mxu0
      %v1149 = vadd.f32 0.0, %v1148
      %1150 = vmatprep.mubr.f32.mxu0 0.0
      %1151 = vmatmul.mubr.f32.gmra.mrb[0].mxu0 %v919
      %v1152 = vpop.f32.mrb[0].mxu0
      %v1153 = vadd.f32 0.0, %v1152
      %v1154 = vpop.f32.mrb[0].mxu0
      %v1155 = vadd.f32 0.0, %v1154
      %1156 = vmatprep.mubr.f32.mxu0 0.0
      %1157 = vmatmul.mubr.f32.gmra.mrb[0].mxu0 %v922
      %v1158 = vpop.f32.mrb[0].mxu0
      %v1159 = vadd.f32 0.0, %v1158
      %v1160 = vpop.f32.mrb[0].mxu0
      %v1161 = vadd.f32 0.0, %v1160
      %1162 = vmatprep.mubr.f32.mxu0 0.0
      %1163 = vmatmul.mubr.f32.gmra.mrb[0].mxu0 %v925
      %v1164 = vpop.f32.mrb[0].mxu0
      %v1165 = vadd.f32 0.0, %v1164
      %v1166 = vpop.f32.mrb[0].mxu0
      %v1167 = vadd.f32 0.0, %v1166
      %1168 = vmatprep.mubr.f32.mxu0 0.0
      %1169 = vmatmul.mubr.f32.gmra.mrb[0].mxu0 %v928
      %v1170 = vpop.f32.mrb[0].mxu0
      %v1171 = vadd.f32 0.0, %v1170
      %v1172 = vpop.f32.mrb[0].mxu0
      %v1173 = vadd.f32 0.0, %v1172
      %1174 = vmatprep.mubr.f32.mxu0 0.0
      %1175 = vmatmul.mubr.f32.gmra.mrb[0].mxu0 %v931
      %v1176 = vpop.f32.mrb[0].mxu0
      %v1177 = vadd.f32 0.0, %v1176
      %v1178 = vpop.f32.mrb[0].mxu0
      %v1179 = vadd.f32 0.0, %v1178
      %1180 = vmatprep.mubr.f32.mxu0 0.0
      %1181 = vmatmul.mubr.f32.gmra.mrb[0].mxu0 %v934
      %v1182 = vpop.f32.mrb[0].mxu0
      %v1183 = vadd.f32 0.0, %v1182
      %v1184 = vpop.f32.mrb[0].mxu0
      %v1185 = vadd.f32 0.0, %v1184
      %1186 = vmatprep.mubr.f32.mxu0 0.0
      %1187 = vmatmul.mubr.f32.gmra.mrb[0].mxu0 %v937
      %v1188 = vpop.f32.mrb[0].mxu0
      %v1189 = vadd.f32 0.0, %v1188
      %v1190 = vpop.f32.mrb[0].mxu0
      %v1191 = vadd.f32 0.0, %v1190
      %1192 = vmatprep.mubr.f32.mxu0 0.0
      %1193 = vmatmul.mubr.f32.gmra.mrb[0].mxu0 %v940
      %v1194 = vpop.f32.mrb[0].mxu0
      %v1195 = vadd.f32 0.0, %v1194
      %v1196 = vpop.f32.mrb[0].mxu0
      %v1197 = vadd.f32 0.0, %v1196
      %1198 = vdwg.mxu0
      %v1199 = vmax.f32 %v1105, %v1107
      %1200 = vmax.xlane.f32.xlu0 %v1199
      %v1201 = vpop.xlane.xlu0 %1200
      %v1202 = vmax.f32 %v1111, %v1113
      %1203 = vmax.xlane.f32.xlu0 %v1202
      %v1204 = vpop.xlane.xlu0 %1203
      %v1205 = vmax.f32 %v1117, %v1119
      %1206 = vmax.xlane.f32.xlu0 %v1205
      %v1207 = vpop.xlane.xlu0 %1206
      %v1208 = vmax.f32 %v1123, %v1125
      %1209 = vmax.xlane.f32.xlu0 %v1208
      %v1210 = vpop.xlane.xlu0 %1209
      %v1211 = vmax.f32 %v1129, %v1131
      %1212 = vmax.xlane.f32.xlu0 %v1211
      %v1213 = vpop.xlane.xlu0 %1212
      %v1214 = vmax.f32 %v1135, %v1137
      %1215 = vmax.xlane.f32.xlu0 %v1214
      %v1216 = vpop.xlane.xlu0 %1215
      %v1217 = vmax.f32 %v1141, %v1143
      %1218 = vmax.xlane.f32.xlu0 %v1217
      %v1219 = vpop.xlane.xlu0 %1218
      %v1220 = vmax.f32 %v1147, %v1149
      %1221 = vmax.xlane.f32.xlu0 %v1220
      %v1222 = vpop.xlane.xlu0 %1221
      %v1223 = vmax.f32 %v1153, %v1155
      %1224 = vmax.xlane.f32.xlu0 %v1223
      %v1225 = vpop.xlane.xlu0 %1224
      %v1226 = vmax.f32 %v1159, %v1161
      %1227 = vmax.xlane.f32.xlu0 %v1226
      %v1228 = vpop.xlane.xlu0 %1227
      %v1229 = vmax.f32 %v1165, %v1167
      %1230 = vmax.xlane.f32.xlu0 %v1229
      %v1231 = vpop.xlane.xlu0 %1230
      %v1232 = vmax.f32 %v1171, %v1173
      %1233 = vmax.xlane.f32.xlu0 %v1232
      %v1234 = vpop.xlane.xlu0 %1233
      %v1235 = vmax.f32 %v1177, %v1179
      %1236 = vmax.xlane.f32.xlu0 %v1235
      %v1237 = vpop.xlane.xlu0 %1236
      %v1238 = vmax.f32 %v1183, %v1185
      %1239 = vmax.xlane.f32.xlu0 %v1238
      %v1240 = vpop.xlane.xlu0 %1239
      %v1241 = vmax.f32 %v1189, %v1191
      %1242 = vmax.xlane.f32.xlu0 %v1241
      %v1243 = vpop.xlane.xlu0 %1242
      %v1244 = vmax.f32 %v1195, %v1197
      %1245 = vmax.xlane.f32.xlu0 %v1244
      %v1246 = vpop.xlane.xlu0 %1245
      %v1247 = vsub.f32 %v1105, %v1201
      %v1248 = vsub.f32 %v1107, %v1201
      %v1249 = vsub.f32 %v1111, %v1204
      %v1250 = vsub.f32 %v1113, %v1204
      %v1251 = vsub.f32 %v1117, %v1207
      %v1252 = vsub.f32 %v1119, %v1207
      %v1253 = vsub.f32 %v1123, %v1210
      %v1254 = vsub.f32 %v1125, %v1210
      %v1255 = vsub.f32 %v1129, %v1213
      %v1256 = vsub.f32 %v1131, %v1213
      %v1257 = vsub.f32 %v1135, %v1216
      %v1258 = vsub.f32 %v1137, %v1216
      %v1259 = vsub.f32 %v1141, %v1219
      %v1260 = vsub.f32 %v1143, %v1219
      %v1261 = vsub.f32 %v1147, %v1222
      %v1262 = vsub.f32 %v1149, %v1222
      %v1263 = vsub.f32 %v1153, %v1225
      %v1264 = vsub.f32 %v1155, %v1225
      %v1265 = vsub.f32 %v1159, %v1228
      %v1266 = vsub.f32 %v1161, %v1228
      %v1267 = vsub.f32 %v1165, %v1231
      %v1268 = vsub.f32 %v1167, %v1231
      %v1269 = vsub.f32 %v1171, %v1234
      %v1270 = vsub.f32 %v1173, %v1234
      %v1271 = vsub.f32 %v1177, %v1237
      %v1272 = vsub.f32 %v1179, %v1237
      %v1273 = vsub.f32 %v1183, %v1240
      %v1274 = vsub.f32 %v1185, %v1240
      %v1275 = vsub.f32 %v1189, %v1243
      %v1276 = vsub.f32 %v1191, %v1243
      %v1277 = vsub.f32 %v1195, %v1246
      %v1278 = vsub.f32 %v1197, %v1246
      %v1279 = vmul.f32 %v1247, 1.442695
      %v1280 = vpow.pop %v1279
      %v1281 = vmul.f32 %v1248, 1.442695
      %v1282 = vpow.pop %v1281
      %v1283 = vmul.f32 %v1249, 1.442695
      %v1284 = vpow.pop %v1283
      %v1285 = vmul.f32 %v1250, 1.442695
      %v1286 = vpow.pop %v1285
      %v1287 = vmul.f32 %v1251, 1.442695
      %v1288 = vpow.pop %v1287
      %v1289 = vmul.f32 %v1252, 1.442695
      %v1290 = vpow.pop %v1289
      %v1291 = vmul.f32 %v1253, 1.442695
      %v1292 = vpow.pop %v1291
      %v1293 = vmul.f32 %v1254, 1.442695
      %v1294 = vpow.pop %v1293
      %v1295 = vmul.f32 %v1255, 1.442695
      %v1296 = vpow.pop %v1295
      %v1297 = vmul.f32 %v1256, 1.442695
      %v1298 = vpow.pop %v1297
      %v1299 = vmul.f32 %v1257, 1.442695
      %v1300 = vpow.pop %v1299
      %v1301 = vmul.f32 %v1258, 1.442695
      %v1302 = vpow.pop %v1301
      %v1303 = vmul.f32 %v1259, 1.442695
      %v1304 = vpow.pop %v1303
      %v1305 = vmul.f32 %v1260, 1.442695
      %v1306 = vpow.pop %v1305
      %v1307 = vmul.f32 %v1261, 1.442695
      %v1308 = vpow.pop %v1307
      %v1309 = vmul.f32 %v1262, 1.442695
      %v1310 = vpow.pop %v1309
      %v1311 = vmul.f32 %v1263, 1.442695
      %v1312 = vpow.pop %v1311
      %v1313 = vmul.f32 %v1264, 1.442695
      %v1314 = vpow.pop %v1313
      %v1315 = vmul.f32 %v1265, 1.442695
      %v1316 = vpow.pop %v1315
      %v1317 = vmul.f32 %v1266, 1.442695
      %v1318 = vpow.pop %v1317
      %v1319 = vmul.f32 %v1267, 1.442695
      %v1320 = vpow.pop %v1319
      %v1321 = vmul.f32 %v1268, 1.442695
      %v1322 = vpow.pop %v1321
      %v1323 = vmul.f32 %v1269, 1.442695
      %v1324 = vpow.pop %v1323
      %v1325 = vmul.f32 %v1270, 1.442695
      %v1326 = vpow.pop %v1325
      %v1327 = vmul.f32 %v1271, 1.442695
      %v1328 = vpow.pop %v1327
      %v1329 = vmul.f32 %v1272, 1.442695
      %v1330 = vpow.pop %v1329
      %v1331 = vmul.f32 %v1273, 1.442695
      %v1332 = vpow.pop %v1331
      %v1333 = vmul.f32 %v1274, 1.442695
      %v1334 = vpow.pop %v1333
      %v1335 = vmul.f32 %v1275, 1.442695
      %v1336 = vpow.pop %v1335
      %v1337 = vmul.f32 %v1276, 1.442695
      %v1338 = vpow.pop %v1337
      %v1339 = vmul.f32 %v1277, 1.442695
      %v1340 = vpow.pop %v1339
      %v1341 = vmul.f32 %v1278, 1.442695
      %v1342 = vpow.pop %v1341
      %v1343 = vadd.f32 %v1280, %v1282
      %1344 = vadd.xlane.f32.xlu0 %v1343
      %v1345 = vpop.xlane.xlu0 %1344
      %v1346 = vadd.f32 %v1284, %v1286
      %1347 = vadd.xlane.f32.xlu0 %v1346
      %v1348 = vpop.xlane.xlu0 %1347
      %v1349 = vadd.f32 %v1288, %v1290
      %1350 = vadd.xlane.f32.xlu0 %v1349
      %v1351 = vpop.xlane.xlu0 %1350
      %v1352 = vadd.f32 %v1292, %v1294
      %1353 = vadd.xlane.f32.xlu0 %v1352
      %v1354 = vpop.xlane.xlu0 %1353
      %v1355 = vadd.f32 %v1296, %v1298
      %1356 = vadd.xlane.f32.xlu0 %v1355
      %v1357 = vpop.xlane.xlu0 %1356
      %v1358 = vadd.f32 %v1300, %v1302
      %1359 = vadd.xlane.f32.xlu0 %v1358
      %v1360 = vpop.xlane.xlu0 %1359
      %v1361 = vadd.f32 %v1304, %v1306
      %1362 = vadd.xlane.f32.xlu0 %v1361
      %v1363 = vpop.xlane.xlu0 %1362
      %v1364 = vadd.f32 %v1308, %v1310
      %1365 = vadd.xlane.f32.xlu0 %v1364
      %v1366 = vpop.xlane.xlu0 %1365
      %v1367 = vadd.f32 %v1312, %v1314
      %1368 = vadd.xlane.f32.xlu0 %v1367
      %v1369 = vpop.xlane.xlu0 %1368
      %v1370 = vadd.f32 %v1316, %v1318
      %1371 = vadd.xlane.f32.xlu0 %v1370
      %v1372 = vpop.xlane.xlu0 %1371
      %v1373 = vadd.f32 %v1320, %v1322
      %1374 = vadd.xlane.f32.xlu0 %v1373
      %v1375 = vpop.xlane.xlu0 %1374
      %v1376 = vadd.f32 %v1324, %v1326
      %1377 = vadd.xlane.f32.xlu0 %v1376
      %v1378 = vpop.xlane.xlu0 %1377
      %v1379 = vadd.f32 %v1328, %v1330
      %1380 = vadd.xlane.f32.xlu0 %v1379
      %v1381 = vpop.xlane.xlu0 %1380
      %v1382 = vadd.f32 %v1332, %v1334
      %1383 = vadd.xlane.f32.xlu0 %v1382
      %v1384 = vpop.xlane.xlu0 %1383
      %v1385 = vadd.f32 %v1336, %v1338
      %1386 = vadd.xlane.f32.xlu0 %v1385
      %v1387 = vpop.xlane.xlu0 %1386
      %v1388 = vadd.f32 %v1340, %v1342
      %1389 = vadd.xlane.f32.xlu0 %v1388
      %v1390 = vpop.xlane.xlu0 %1389
      %v1391 = vrcp.pop %v1345
      %v1392 = vrcp.pop %v1348
      %v1393 = vrcp.pop %v1351
      %v1394 = vrcp.pop %v1354
      %v1395 = vrcp.pop %v1357
      %v1396 = vrcp.pop %v1360
      %v1397 = vrcp.pop %v1363
      %v1398 = vrcp.pop %v1366
      %v1399 = vrcp.pop %v1369
      %v1400 = vrcp.pop %v1372
      %v1401 = vrcp.pop %v1375
      %v1402 = vrcp.pop %v1378
      %v1403 = vrcp.pop %v1381
      %v1404 = vrcp.pop %v1384
      %v1405 = vrcp.pop %v1387
      %v1406 = vrcp.pop %v1390
      %v1407 = vmul.f32 %v1280, %v1391
      %v1408 = vmul.f32 %v1282, %v1391
      %v1409 = vmul.f32 %v1284, %v1392
      %v1410 = vmul.f32 %v1286, %v1392
      %v1411 = vmul.f32 %v1288, %v1393
      %v1412 = vmul.f32 %v1290, %v1393
      %v1413 = vmul.f32 %v1292, %v1394
      %v1414 = vmul.f32 %v1294, %v1394
      %v1415 = vmul.f32 %v1296, %v1395
      %v1416 = vmul.f32 %v1298, %v1395
      %v1417 = vmul.f32 %v1300, %v1396
      %v1418 = vmul.f32 %v1302, %v1396
      %v1419 = vmul.f32 %v1304, %v1397
      %v1420 = vmul.f32 %v1306, %v1397
      %v1421 = vmul.f32 %v1308, %v1398
      %v1422 = vmul.f32 %v1310, %v1398
      %v1423 = vmul.f32 %v1312, %v1399
      %v1424 = vmul.f32 %v1314, %v1399
      %v1425 = vmul.f32 %v1316, %v1400
      %v1426 = vmul.f32 %v1318, %v1400
      %v1427 = vmul.f32 %v1320, %v1401
      %v1428 = vmul.f32 %v1322, %v1401
      %v1429 = vmul.f32 %v1324, %v1402
      %v1430 = vmul.f32 %v1326, %v1402
      %v1431 = vmul.f32 %v1328, %v1403
      %v1432 = vmul.f32 %v1330, %v1403
      %v1433 = vmul.f32 %v1332, %v1404
      %v1434 = vmul.f32 %v1334, %v1404
      %v1435 = vmul.f32 %v1336, %v1405
      %v1436 = vmul.f32 %v1338, %v1405
      %v1437 = vmul.f32 %v1340, %v1406
      %v1438 = vmul.f32 %v1342, %v1406
      %v1439 = vld [vmem:[%s299] sm:$0xff]
      %v1440 = vld [vmem:[%s299 + $0x8] sm:$0xff]
      %v1441 = vld [vmem:[%s299 + $0x10] sm:$0xff]
      %v1442 = vld [vmem:[%s299 + $0x18] sm:$0xff]
      %v1443 = vld [vmem:[%s299 + $0x20] sm:$0xff]
      %v1444 = vld [vmem:[%s299 + $0x28] sm:$0xff]
      %v1445 = vld [vmem:[%s299 + $0x30] sm:$0xff]
      %v1446 = vld [vmem:[%s299 + $0x38] sm:$0xff]
      %v1447 = vld [vmem:[%s299 + $0x40] sm:$0xff]
      %v1448 = vld [vmem:[%s299 + $0x48] sm:$0xff]
      %v1449 = vld [vmem:[%s299 + $0x50] sm:$0xff]
      %v1450 = vld [vmem:[%s299 + $0x58] sm:$0xff]
      %v1451 = vld [vmem:[%s299 + $0x60] sm:$0xff]
      %v1452 = vld [vmem:[%s299 + $0x68] sm:$0xff]
      %v1453 = vld [vmem:[%s299 + $0x70] sm:$0xff]
      %v1454 = vld [vmem:[%s299 + $0x78] sm:$0xff]
      %v1455 = vld [vmem:[%s299 + $0x80] sm:$0xff]
      %v1456 = vld [vmem:[%s299 + $0x88] sm:$0xff]
      %v1457 = vld [vmem:[%s299 + $0x90] sm:$0xff]
      %v1458 = vld [vmem:[%s299 + $0x98] sm:$0xff]
      %v1459 = vld [vmem:[%s299 + $0xa0] sm:$0xff]
      %v1460 = vld [vmem:[%s299 + $0xa8] sm:$0xff]
      %v1461 = vld [vmem:[%s299 + $0xb0] sm:$0xff]
      %v1462 = vld [vmem:[%s299 + $0xb8] sm:$0xff]
      %v1463 = vld [vmem:[%s299 + $0xc0] sm:$0xff]
      %v1464 = vld [vmem:[%s299 + $0xc8] sm:$0xff]
      %v1465 = vld [vmem:[%s299 + $0xd0] sm:$0xff]
      %v1466 = vld [vmem:[%s299 + $0xd8] sm:$0xff]
      %v1467 = vld [vmem:[%s299 + $0xe0] sm:$0xff]
      %v1468 = vld [vmem:[%s299 + $0xe8] sm:$0xff]
      %v1469 = vld [vmem:[%s299 + $0xf0] sm:$0xff]
      %v1470 = vld [vmem:[%s299 + $0xf8] sm:$0xff]
      %v1471 = vmul.f32 %v1407, %v1439
      %v1472 = vmul.f32 %v1408, %v1440
      %v1473 = vmul.f32 %v1409, %v1441
      %v1474 = vmul.f32 %v1410, %v1442
      %v1475 = vmul.f32 %v1411, %v1443
      %v1476 = vmul.f32 %v1412, %v1444
      %v1477 = vmul.f32 %v1413, %v1445
      %v1478 = vmul.f32 %v1414, %v1446
      %v1479 = vmul.f32 %v1415, %v1447
      %v1480 = vmul.f32 %v1416, %v1448
      %v1481 = vmul.f32 %v1417, %v1449
      %v1482 = vmul.f32 %v1418, %v1450
      %v1483 = vmul.f32 %v1419, %v1451
      %v1484 = vmul.f32 %v1420, %v1452
      %v1485 = vmul.f32 %v1421, %v1453
      %v1486 = vmul.f32 %v1422, %v1454
      %v1487 = vmul.f32 %v1423, %v1455
      %v1488 = vmul.f32 %v1424, %v1456
      %v1489 = vmul.f32 %v1425, %v1457
      %v1490 = vmul.f32 %v1426, %v1458
      %v1491 = vmul.f32 %v1427, %v1459
      %v1492 = vmul.f32 %v1428, %v1460
      %v1493 = vmul.f32 %v1429, %v1461
      %v1494 = vmul.f32 %v1430, %v1462
      %v1495 = vmul.f32 %v1431, %v1463
      %v1496 = vmul.f32 %v1432, %v1464
      %v1497 = vmul.f32 %v1433, %v1465
      %v1498 = vmul.f32 %v1434, %v1466
      %v1499 = vmul.f32 %v1435, %v1467
      %v1500 = vmul.f32 %v1436, %v1468
      %v1501 = vmul.f32 %v1437, %v1469
      %v1502 = vmul.f32 %v1438, %v1470
      %1503 = vrot.lane.b32.xlu0 %v735, 120
      %v1504 = vpop.permute.xlu0 %1503
      %1505 = vrot.lane.b32.xlu0 %v740, 120
      %v1506 = vpop.permute.xlu0 %1505
      %1507 = vrot.lane.b32.xlu0 %v745, 120
      %v1508 = vpop.permute.xlu0 %1507
      %1509 = vrot.lane.b32.xlu0 %v750, 120
      %v1510 = vpop.permute.xlu0 %1509
      %1511 = vrot.lane.b32.xlu0 %v755, 120
      %v1512 = vpop.permute.xlu0 %1511
      %1513 = vrot.lane.b32.xlu0 %v760, 120
      %v1514 = vpop.permute.xlu0 %1513
      %1515 = vrot.lane.b32.xlu0 %v765, 120
      %v1516 = vpop.permute.xlu0 %1515
      %1517 = vrot.lane.b32.xlu0 %v770, 120
      %v1518 = vpop.permute.xlu0 %1517
      %1519 = vrot.lane.b32.xlu0 %v775, 120
      %v1520 = vpop.permute.xlu0 %1519
      %1521 = vrot.lane.b32.xlu0 %v780, 120
      %v1522 = vpop.permute.xlu0 %1521
      %1523 = vrot.lane.b32.xlu0 %v785, 120
      %v1524 = vpop.permute.xlu0 %1523
      %1525 = vrot.lane.b32.xlu0 %v790, 120
      %v1526 = vpop.permute.xlu0 %1525
      %1527 = vrot.lane.b32.xlu0 %v795, 120
      %v1528 = vpop.permute.xlu0 %1527
      %1529 = vrot.lane.b32.xlu0 %v800, 120
      %v1530 = vpop.permute.xlu0 %1529
      %1531 = vrot.lane.b32.xlu0 %v805, 120
      %v1532 = vpop.permute.xlu0 %1531
      %1533 = vrot.lane.b32.xlu0 %v810, 120
      %v1534 = vpop.permute.xlu0 %1533
      %1535 = vrot.lane.b32.xlu0 %v815, 120
      %v1536 = vpop.permute.xlu0 %1535
      %1537 = vrot.lane.b32.xlu0 %v820, 120
      %v1538 = vpop.permute.xlu0 %1537
      %1539 = vrot.lane.b32.xlu0 %v825, 120
      %v1540 = vpop.permute.xlu0 %1539
      %1541 = vrot.lane.b32.xlu0 %v830, 120
      %v1542 = vpop.permute.xlu0 %1541
      %1543 = vrot.lane.b32.xlu0 %v835, 120
      %v1544 = vpop.permute.xlu0 %1543
      %1545 = vrot.lane.b32.xlu0 %v840, 120
      %v1546 = vpop.permute.xlu0 %1545
      %1547 = vrot.lane.b32.xlu0 %v845, 120
      %v1548 = vpop.permute.xlu0 %1547
      %1549 = vrot.lane.b32.xlu0 %v850, 120
      %v1550 = vpop.permute.xlu0 %1549
      %1551 = vrot.lane.b32.xlu0 %v855, 120
      %v1552 = vpop.permute.xlu0 %1551
      %1553 = vrot.lane.b32.xlu0 %v860, 120
      %v1554 = vpop.permute.xlu0 %1553
      %1555 = vrot.lane.b32.xlu0 %v865, 120
      %v1556 = vpop.permute.xlu0 %1555
      %1557 = vrot.lane.b32.xlu0 %v870, 120
      %v1558 = vpop.permute.xlu0 %1557
      %1559 = vrot.lane.b32.xlu0 %v875, 120
      %v1560 = vpop.permute.xlu0 %1559
      %1561 = vrot.lane.b32.xlu0 %v880, 120
      %v1562 = vpop.permute.xlu0 %1561
      %1563 = vrot.lane.b32.xlu0 %v885, 120
      %v1564 = vpop.permute.xlu0 %1563
      %1565 = vrot.lane.b32.xlu0 %v890, 120
      %v1566 = vpop.permute.xlu0 %1565
      %1599 = vmatprep.subr.mxu0 0.0
      %1600 = vmatpush1.msra.mxu0 %v1504
      %1601 = vmatprep.subr.mxu0 0.0
      %1602 = vmatpush1.msra.mxu0 %v1506
      %1603 = vmatprep.subr.mxu0 0.0
      %1604 = vmatpush1.msra.mxu0 %v1508
      %1605 = vmatprep.subr.mxu0 0.0
      %1606 = vmatpush1.msra.mxu0 %v1510
      %1607 = vmatprep.subr.mxu0 0.0
      %1608 = vmatpush1.msra.mxu0 %v1512
      %1609 = vmatprep.subr.mxu0 0.0
      %1610 = vmatpush1.msra.mxu0 %v1514
      %1611 = vmatprep.subr.mxu0 0.0
      %1612 = vmatpush1.msra.mxu0 %v1516
      %1613 = vmatprep.subr.mxu0 0.0
      %1614 = vmatpush1.msra.mxu0 %v1518
      %1615 = vmatprep.subr.mxu0 0.0
      %1616 = vmatpush1.msra.mxu0 %v1520
      %1617 = vmatprep.subr.mxu0 0.0
      %1618 = vmatpush1.msra.mxu0 %v1522
      %1619 = vmatprep.subr.mxu0 0.0
      %1620 = vmatpush1.msra.mxu0 %v1524
      %1621 = vmatprep.subr.mxu0 0.0
      %1622 = vmatpush1.msra.mxu0 %v1526
      %1623 = vmatprep.subr.mxu0 0.0
      %1624 = vmatpush1.msra.mxu0 %v1528
      %1625 = vmatprep.subr.mxu0 0.0
      %1626 = vmatpush1.msra.mxu0 %v1530
      %1627 = vmatprep.subr.mxu0 0.0
      %1628 = vmatpush1.msra.mxu0 %v1532
      %1629 = vmatprep.subr.mxu0 0.0
      %1630 = vmatpush1.msra.mxu0 %v1534
      %1631 = vmatprep.subr.mxu0 0.0
      %1632 = vmatpush1.msra.mxu0 %v1536
      %1633 = vmatprep.subr.mxu0 0.0
      %1634 = vmatpush1.msra.mxu0 %v1538
      %1635 = vmatprep.subr.mxu0 0.0
      %1636 = vmatpush1.msra.mxu0 %v1540
      %1637 = vmatprep.subr.mxu0 0.0
      %1638 = vmatpush1.msra.mxu0 %v1542
      %1639 = vmatprep.subr.mxu0 0.0
      %1640 = vmatpush1.msra.mxu0 %v1544
      %1641 = vmatprep.subr.mxu0 0.0
      %1642 = vmatpush1.msra.mxu0 %v1546
      %1643 = vmatprep.subr.mxu0 0.0
      %1644 = vmatpush1.msra.mxu0 %v1548
      %1645 = vmatprep.subr.mxu0 0.0
      %1646 = vmatpush1.msra.mxu0 %v1550
      %1647 = vmatprep.subr.mxu0 0.0
      %1648 = vmatpush1.msra.mxu0 %v1552
      %1649 = vmatprep.subr.mxu0 0.0
      %1650 = vmatpush1.msra.mxu0 %v1554
      %1651 = vmatprep.subr.mxu0 0.0
      %1652 = vmatpush1.msra.mxu0 %v1556
      %1653 = vmatprep.subr.mxu0 0.0
      %1654 = vmatpush1.msra.mxu0 %v1558
      %1655 = vmatprep.subr.mxu0 0.0
      %1656 = vmatpush1.msra.mxu0 %v1560
      %1657 = vmatprep.subr.mxu0 0.0
      %1658 = vmatpush1.msra.mxu0 %v1562
      %1659 = vmatprep.subr.mxu0 0.0
      %1660 = vmatpush1.msra.mxu0 %v1564
      %1661 = vmatprep.subr.mxu0 0.0
      %1662 = vmatpush1.msra.mxu0 %v1566
      %1663 = vmatprep.mubr.f32.mxu0 %v1472
      %1664 = vmatmul.mubr.f32.gmra.mrb[0].mxu0 %v1471
      %v1665 = vpop.f32.mrb[0].mxu0
      %v1666 = vadd.f32 0.0, %v1665
      %v1667 = vpop.f32.mrb[0].mxu0
      %1668 = vmatprep.mubr.f32.mxu0 %v1474
      %1669 = vmatmul.mubr.f32.gmra.mrb[0].mxu0 %v1473
      %v1670 = vpop.f32.mrb[0].mxu0
      %v1671 = vadd.f32 0.0, %v1670
      %v1672 = vpop.f32.mrb[0].mxu0
      %1673 = vmatprep.mubr.f32.mxu0 %v1476
      %1674 = vmatmul.mubr.f32.gmra.mrb[0].mxu0 %v1475
      %v1675 = vpop.f32.mrb[0].mxu0
      %v1676 = vadd.f32 0.0, %v1675
      %v1677 = vpop.f32.mrb[0].mxu0
      %1678 = vmatprep.mubr.f32.mxu0 %v1478
      %1679 = vmatmul.mubr.f32.gmra.mrb[0].mxu0 %v1477
      %v1680 = vpop.f32.mrb[0].mxu0
      %v1681 = vadd.f32 0.0, %v1680
      %v1682 = vpop.f32.mrb[0].mxu0
      %1683 = vmatprep.mubr.f32.mxu0 %v1480
      %1684 = vmatmul.mubr.f32.gmra.mrb[0].mxu0 %v1479
      %v1685 = vpop.f32.mrb[0].mxu0
      %v1686 = vadd.f32 0.0, %v1685
      %v1687 = vpop.f32.mrb[0].mxu0
      %1688 = vmatprep.mubr.f32.mxu0 %v1482
      %1689 = vmatmul.mubr.f32.gmra.mrb[0].mxu0 %v1481
      %v1690 = vpop.f32.mrb[0].mxu0
      %v1691 = vadd.f32 0.0, %v1690
      %v1692 = vpop.f32.mrb[0].mxu0
      %1693 = vmatprep.mubr.f32.mxu0 %v1484
      %1694 = vmatmul.mubr.f32.gmra.mrb[0].mxu0 %v1483
      %v1695 = vpop.f32.mrb[0].mxu0
      %v1696 = vadd.f32 0.0, %v1695
      %v1697 = vpop.f32.mrb[0].mxu0
      %1698 = vmatprep.mubr.f32.mxu0 %v1486
      %1699 = vmatmul.mubr.f32.gmra.mrb[0].mxu0 %v1485
      %v1700 = vpop.f32.mrb[0].mxu0
      %v1701 = vadd.f32 0.0, %v1700
      %v1702 = vpop.f32.mrb[0].mxu0
      %1703 = vmatprep.mubr.f32.mxu0 %v1488
      %1704 = vmatmul.mubr.f32.gmra.mrb[0].mxu0 %v1487
      %v1705 = vpop.f32.mrb[0].mxu0
      %v1706 = vadd.f32 0.0, %v1705
      %v1707 = vpop.f32.mrb[0].mxu0
      %1708 = vmatprep.mubr.f32.mxu0 %v1490
      %1709 = vmatmul.mubr.f32.gmra.mrb[0].mxu0 %v1489
      %v1710 = vpop.f32.mrb[0].mxu0
      %v1711 = vadd.f32 0.0, %v1710
      %v1712 = vpop.f32.mrb[0].mxu0
      %1713 = vmatprep.mubr.f32.mxu0 %v1492
      %1714 = vmatmul.mubr.f32.gmra.mrb[0].mxu0 %v1491
      %v1715 = vpop.f32.mrb[0].mxu0
      %v1716 = vadd.f32 0.0, %v1715
      %v1717 = vpop.f32.mrb[0].mxu0
      %1718 = vmatprep.mubr.f32.mxu0 %v1494
      %1719 = vmatmul.mubr.f32.gmra.mrb[0].mxu0 %v1493
      %v1720 = vpop.f32.mrb[0].mxu0
      %v1721 = vadd.f32 0.0, %v1720
      %v1722 = vpop.f32.mrb[0].mxu0
      %1723 = vmatprep.mubr.f32.mxu0 %v1496
      %1724 = vmatmul.mubr.f32.gmra.mrb[0].mxu0 %v1495
      %v1725 = vpop.f32.mrb[0].mxu0
      %v1726 = vadd.f32 0.0, %v1725
      %v1727 = vpop.f32.mrb[0].mxu0
      %1728 = vmatprep.mubr.f32.mxu0 %v1498
      %1729 = vmatmul.mubr.f32.gmra.mrb[0].mxu0 %v1497
      %v1730 = vpop.f32.mrb[0].mxu0
      %v1731 = vadd.f32 0.0, %v1730
      %v1732 = vpop.f32.mrb[0].mxu0
      %1733 = vmatprep.mubr.f32.mxu0 %v1500
      %1734 = vmatmul.mubr.f32.gmra.mrb[0].mxu0 %v1499
      %v1735 = vpop.f32.mrb[0].mxu0
      %v1736 = vadd.f32 0.0, %v1735
      %v1737 = vpop.f32.mrb[0].mxu0
      %1738 = vmatprep.mubr.f32.mxu0 %v1502
      %1739 = vmatmul.mubr.f32.gmra.mrb[0].mxu0 %v1501
      %v1740 = vpop.f32.mrb[0].mxu0
      %v1741 = vadd.f32 0.0, %v1740
      %v1742 = vpop.f32.mrb[0].mxu0
      %1743 = vdwg.mxu0
      %1744 = vst.msk [vmem:[%s305] sm:$0xff] %vm363, %v1666
      %1745 = vst.msk [vmem:[%s305 + $0x8] sm:$0xff] %vm363, %v1671
      %1746 = vst.msk [vmem:[%s305 + $0x10] sm:$0xff] %vm363, %v1676
      %1747 = vst.msk [vmem:[%s305 + $0x18] sm:$0xff] %vm363, %v1681
      %1748 = vst.msk [vmem:[%s305 + $0x20] sm:$0xff] %vm363, %v1686
      %1749 = vst.msk [vmem:[%s305 + $0x28] sm:$0xff] %vm363, %v1691
      %1750 = vst.msk [vmem:[%s305 + $0x30] sm:$0xff] %vm363, %v1696
      %1751 = vst.msk [vmem:[%s305 + $0x38] sm:$0xff] %vm363, %v1701
      %1752 = vst.msk [vmem:[%s305 + $0x40] sm:$0xff] %vm363, %v1706
      %1753 = vst.msk [vmem:[%s305 + $0x48] sm:$0xff] %vm363, %v1711
      %1754 = vst.msk [vmem:[%s305 + $0x50] sm:$0xff] %vm363, %v1716
      %1755 = vst.msk [vmem:[%s305 + $0x58] sm:$0xff] %vm363, %v1721
      %1756 = vst.msk [vmem:[%s305 + $0x60] sm:$0xff] %vm363, %v1726
      %1757 = vst.msk [vmem:[%s305 + $0x68] sm:$0xff] %vm363, %v1731
      %1758 = vst.msk [vmem:[%s305 + $0x70] sm:$0xff] %vm363, %v1736
      %1759 = vst.msk [vmem:[%s305 + $0x78] sm:$0xff] %vm363, %v1741
      %s1760 = smul.u32 16, %s18
      %p1761 = scmp.lt.s32.totalorder %s1760, 31
      %s1762 = scalar_select %p1761, %s1760, 31
      %s1763 = smul.addr %s1762, 8
      %s1764 = scalar_lea.vmem %s7, %s1763
      // Predicated region
      $region49: #{tpu_custom_call.1} parent=47 // pred_check
        %p1765 = pneg %p193
      $region50: #{tpu_custom_call.1} parent=47 // pred_check_branch
        %1767 = sbr.rel (%p1765) target = $region52
      $region51: #{tpu_custom_call.1} parent=47 // pred_region
        %s1768 = smul.u32 16, %s18
      $region52: #{tpu_custom_call.1} parent=47 // pred_fallthru
        _
    $region48: #{tpu_custom_call.1} parent=5 // pred_fallthru
      _
    %p1769 = scmp.le.s32.totalorder 2, %s13
    // Predicated region
    $region53: #{tpu_custom_call.1} parent=5 // pred_check
      %p1770 = pneg %p1769
    $region54: #{tpu_custom_call.1} parent=5 // pred_check_branch
      %1772 = sbr.rel (%p1770) target = $region56
    $region55: #{tpu_custom_call.1} parent=5 // pred_region
      %s1773 = ssub.s32 %s13, 2
      // Predicated region
      $region57: #{tpu_custom_call.1} parent=55 // pred_check
        %p1774 = pneg %p199
      $region58: #{tpu_custom_call.1} parent=55 // pred_check_branch
        %1776 = sbr.rel (%p1774) target = $region60
      $region59: #{tpu_custom_call.1} parent=55 // pred_region
        %s1777 = smul.u32 16, %s19
        %p1778 = scmp.lt.s32.totalorder %s1777, 31
        %s1779 = scalar_select %p1778, %s1777, 31
        %s1780 = smul.addr %s1779, 8
        %s1781 = scalar_lea.vmem %s7, %s1780
      $region60: #{tpu_custom_call.1} parent=55 // pred_fallthru
        _
    $region56: #{tpu_custom_call.1} parent=5 // pred_fallthru
      _
  $region6: #{tpu_custom_call.1} parent=0 // loop_footer
    %s17 = sadd.s32 1, %s13
  $region7: #{tpu_custom_call.1} parent=0 // loop_footer_branch
    %12 = sbr.rel target = $region3
  $region8: #{tpu_custom_call.1} parent=0 // loop_exit
    _

</llo_original>
